<compile_context>
chip_gen: v6e
topology: v6e:2x2x1
jax: 0.10.0
libtpu: 0.0.40
codegen_flags: <defaults>
</compile_context>

<pallas_src>
import functools
import math

import jax
import jax.numpy as jnp
import numpy as np
from jax import lax
from jax.experimental import pallas as pl
from jax.experimental.pallas import tpu as pltpu

_VMEM_BUDGET = 20 * 1024 * 1024     # per-kernel working-set target (fits every generation)
_VMEM_LIMIT = 56 * 1024 * 1024      # scoped-VMEM ceiling (v7x TensorCore = 64 MiB physical)


# ----------------------------- small host helpers ---------------------------

def _round_up(x, m):
    return (x + m - 1) // m * m


def _best_divisor(n, cap, mult):
    """Largest divisor of n that is a multiple of `mult` and <= cap."""
    best = None
    d = mult
    top = min(cap, n)
    while d <= top:
        if n % d == 0:
            best = d
        d += mult
    if best is None:
        best = n if n <= cap else mult
    return best


def _elementwise_rows(M, C):
    cap = max(8, min(4096, ((1 << 20) // max(4 * C, 1)) // 8 * 8))
    return _best_divisor(M, cap, 8)


def _matmul_tiles(M, K, N):
    tm = _best_divisor(M, 512, 8)
    if N < 128:
        tn = N
    else:
        # keep >=2 output-channel blocks when possible so the parallel axis can shard
        # across the two v7x TensorCores.
        tn = _best_divisor(N, max(128, min(512, N // 2)), 128)

    def vmem(tk_):
        return (2 * 2 * (tm * tk_ + tk_ * tn)      # bf16 A/B tiles, double-buffered
                + 2 * 4 * tm * tn                  # f32 output tile, double-buffered
                + 4 * tm * tn                      # f32 accumulator scratch
                + 6 * 4 * tn)                      # bias / stats tiles

    if vmem(K) <= _VMEM_BUDGET:
        tk = K                                     # resident weights, no K streaming
    else:
        tk = None
        for cand in (2048, 1024, 512, 256, 128):
            if K % cand == 0 and vmem(cand) <= _VMEM_BUDGET:
                tk = cand
                break
        if tk is None:
            tk = K
    return tm, tn, tk


# ----------------------------- Pallas kernels ------------------------------

def _mm_kernel(a_ref, b_ref, bias_ref, o_ref, s_ref, q_ref, acc_ref):
    """Tiled bf16 matmul with fused bias add and per-column sum / sum-of-squares.
    Grid = (j: N blocks [parallel], i: M blocks, k: K blocks)."""
    i = pl.program_id(1)
    k = pl.program_id(2)
    nk = pl.num_programs(2)

    @pl.when(k == 0)
    def _():
        acc_ref[...] = jnp.zeros_like(acc_ref)

    @pl.when((i == 0) & (k == 0))
    def _():
        s_ref[...] = jnp.zeros_like(s_ref)
        q_ref[...] = jnp.zeros_like(q_ref)

    acc_ref[...] += jnp.dot(a_ref[...], b_ref[...],
                            preferred_element_type=jnp.float32)

    @pl.when(k == nk - 1)
    def _():
        y = acc_ref[...] + bias_ref[...]
        o_ref[...] = y
        s_ref[...] += jnp.sum(y, axis=0, keepdims=True)
        q_ref[...] += jnp.sum(y * y, axis=0, keepdims=True)


@functools.partial(jax.jit, static_argnames=("tm", "tn", "tk"))
def _mm_call(a, b, bias, *, tm, tn, tk):
    M, K = a.shape
    N = b.shape[1]
    grid = (N // tn, M // tm, K // tk)
    return pl.pallas_call(
        _mm_kernel,
        out_shape=(jax.ShapeDtypeStruct((M, N), jnp.float32),
                   jax.ShapeDtypeStruct((1, N), jnp.float32),
                   jax.ShapeDtypeStruct((1, N), jnp.float32)),
        grid_spec=pltpu.PrefetchScalarGridSpec(
            num_scalar_prefetch=0,
            grid=grid,
            in_specs=[pl.BlockSpec((tm, tk), lambda j, i, k: (i, k)),
                      pl.BlockSpec((tk, tn), lambda j, i, k: (k, j)),
                      pl.BlockSpec((1, tn), lambda j, i, k: (0, j))],
            out_specs=(pl.BlockSpec((tm, tn), lambda j, i, k: (i, j)),
                       pl.BlockSpec((1, tn), lambda j, i, k: (0, j)),
                       pl.BlockSpec((1, tn), lambda j, i, k: (0, j))),
            scratch_shapes=[pltpu.VMEM((tm, tn), jnp.float32)]),
        compiler_params=pltpu.CompilerParams(
            dimension_semantics=("parallel", "arbitrary", "arbitrary"),
            vmem_limit_bytes=_VMEM_LIMIT),
    )(a, b, bias)


def _matmul_bias_stats(a, b, bias):
    """(M, K)bf16 @ (K, N)bf16 -> f32 output plus fused column sum / sum-of-squares."""
    M, K = a.shape
    N = b.shape[1]
    Mp = _round_up(M, 8)
    if Mp != M:                      # only the tiny FC head ever hits this
        a = jnp.pad(a, ((0, Mp - M), (0, 0)))
    bias2 = (jnp.zeros((1, N), jnp.float32) if bias is None
             else bias.reshape(1, N).astype(jnp.float32))
    tm, tn, tk = _matmul_tiles(Mp, K, N)
    y, s, q = _mm_call(a, b, bias2, tm=tm, tn=tn, tk=tk)
    if Mp != M:
        y = y[:M]
    return y, s[0], q[0]


def _affine_kernel(x_ref, sc_ref, sh_ref, o_ref, *, relu):
    y = x_ref[...] * sc_ref[...] + sh_ref[...]
    if relu:
        y = jnp.maximum(y, 0.0)
    o_ref[...] = y


def _affine_res_kernel(x_ref, sc_ref, sh_ref, r_ref, o_ref, *, relu):
    y = x_ref[...] * sc_ref[...] + sh_ref[...] + r_ref[...]
    if relu:
        y = jnp.maximum(y, 0.0)
    o_ref[...] = y


@functools.partial(jax.jit, static_argnames=("tr", "relu", "has_res"))
def _affine_call(x, sc, sh, res, *, tr, relu, has_res):
    M, C = x.shape
    row = pl.BlockSpec((tr, C), lambda i: (i, 0))
    vec = pl.BlockSpec((1, C), lambda i: (0, 0))
    if has_res:
        kern = functools.partial(_affine_res_kernel, relu=relu)
        in_specs = [row, vec, vec, row]
        args = (x, sc, sh, res)
    else:
        kern = functools.partial(_affine_kernel, relu=relu)
        in_specs = [row, vec, vec]
        args = (x, sc, sh)
    return pl.pallas_call(
        kern,
        out_shape=jax.ShapeDtypeStruct((M, C), jnp.float32),
        grid_spec=pltpu.PrefetchScalarGridSpec(
            num_scalar_prefetch=0,
            grid=(M // tr,),
            in_specs=in_specs,
            out_specs=row),
        compiler_params=pltpu.CompilerParams(
            dimension_semantics=("parallel",),
            vmem_limit_bytes=_VMEM_LIMIT),
    )(*args)


def _colsum_kernel(x_ref, s_ref):
    @pl.when(pl.program_id(0) == 0)
    def _():
        s_ref[...] = jnp.zeros_like(s_ref)
    s_ref[...] += jnp.sum(x_ref[...], axis=0, keepdims=True)


@functools.partial(jax.jit, static_argnames=("tr",))
def _colsum_call(x, *, tr):
    M, C = x.shape
    return pl.pallas_call(
        _colsum_kernel,
        out_shape=jax.ShapeDtypeStruct((1, C), jnp.float32),
        grid_spec=pltpu.PrefetchScalarGridSpec(
            num_scalar_prefetch=0,
            grid=(M // tr,),
            in_specs=[pl.BlockSpec((tr, C), lambda i: (i, 0))],
            out_specs=pl.BlockSpec((1, C), lambda i: (0, 0))),
        compiler_params=pltpu.CompilerParams(
            dimension_semantics=("arbitrary",),
            vmem_limit_bytes=_VMEM_LIMIT),
    )(x)


def _tapmax_kernel(t_ref, o_ref):
    v = t_ref[0]
    for t in range(1, t_ref.shape[0]):
        v = jnp.maximum(v, t_ref[t])
    o_ref[...] = v


@functools.partial(jax.jit, static_argnames=("tr",))
def _tapmax_call(taps, *, tr):
    T, M, C = taps.shape
    return pl.pallas_call(
        _tapmax_kernel,
        out_shape=jax.ShapeDtypeStruct((M, C), jnp.float32),
        grid_spec=pltpu.PrefetchScalarGridSpec(
            num_scalar_prefetch=0,
            grid=(M // tr,),
            in_specs=[pl.BlockSpec((T, tr, C), lambda i: (0, i, 0))],
            out_specs=pl.BlockSpec((tr, C), lambda i: (i, 0))),
        compiler_params=pltpu.CompilerParams(
            dimension_semantics=("parallel",),
            vmem_limit_bytes=_VMEM_LIMIT),
    )(taps)


# ------------------------------- glue (JAX) --------------------------------

def _conv_out_size(size, k, stride, padding, dilation):
    return (size + 2 * padding - dilation * (k - 1) - 1) // stride + 1


def _im2col_bf16(x, kh, kw, stride, padding, dilation):
    """NHWC f32 -> (N*Ho*Wo, kh*kw*C) bf16 slab, tap-major / channel-minor K order."""
    N, H, W, C = x.shape
    Ho = _conv_out_size(H, kh, stride, padding, dilation)
    Wo = _conv_out_size(W, kw, stride, padding, dilation)
    if kh == 1 and kw == 1 and stride == 1 and padding == 0:
        return x.astype(jnp.bfloat16).reshape(N * Ho * Wo, C), (N, Ho, Wo)
    xp = jnp.pad(x, ((0, 0), (padding, padding), (padding, padding), (0, 0)))
    xp = xp.astype(jnp.bfloat16)
    cols = []
    for i in range(kh):
        for j in range(kw):
            hs, ws = i * dilation, j * dilation
            cols.append(xp[:, hs:hs + stride * (Ho - 1) + 1:stride,
                              ws:ws + stride * (Wo - 1) + 1:stride, :])
    a = jnp.stack(cols, axis=3)                     # (N, Ho, Wo, T, C)
    return a.reshape(N * Ho * Wo, kh * kw * C), (N, Ho, Wo)


def pack_conv_weight(w):
    """(Cout, Cin, KH, KW) torch layout -> (KH*KW*Cin, Cout) bf16 (matches _im2col_bf16)."""
    Cout, Cin, KH, KW = w.shape
    return jnp.transpose(w, (2, 3, 1, 0)).reshape(KH * KW * Cin, Cout).astype(jnp.bfloat16)


@functools.partial(jax.jit,
                   static_argnames=("kh", "kw", "stride", "padding", "dilation", "relu"))
def conv_bn_act(x, wp, gamma, beta, residual, *, kh, kw, stride, padding, dilation, relu):
    """Conv (packed bf16 weights) + training-mode BatchNorm2d (+residual)(+ReLU), NHWC."""
    a, (N, Ho, Wo) = _im2col_bf16(x, kh, kw, stride, padding, dilation)
    y, s, q = _matmul_bias_stats(a, wp, None)
    M = N * Ho * Wo
    C = wp.shape[1]
    mean = s / M
    var = jnp.maximum(q / M - mean * mean, 0.0)     # biased batch variance (f32)
    scale = gamma * lax.rsqrt(var + 1e-5)
    shift = beta - mean * scale
    res2d = residual.reshape(M, C) if residual is not None else None
    out = _affine_call(y, scale.reshape(1, C), shift.reshape(1, C), res2d,
                       tr=_elementwise_rows(M, C), relu=relu,
                       has_res=residual is not None)
    return out.reshape(N, Ho, Wo, C)


@functools.partial(jax.jit,
                   static_argnames=("kh", "kw", "stride", "padding", "dilation"))
def conv_nhwc(x, wp, bias, *, kh, kw, stride, padding, dilation):
    """Plain conv (optional fused bias, no BN / activation). NHWC f32 -> NHWC f32."""
    a, (N, Ho, Wo) = _im2col_bf16(x, kh, kw, stride, padding, dilation)
    y, _, _ = _matmul_bias_stats(a, wp, bias)
    return y.reshape(N, Ho, Wo, wp.shape[1])


@functools.partial(jax.jit, static_argnames=("cout",))
def conv_transpose_k4s2p1(x, k3p, *, cout):
    """ConvTranspose2d(k=4,s=2,p=1) == 3x3 sub-pixel conv (4 parities) + pixel shuffle."""
    y = conv_nhwc(x, k3p, None, kh=3, kw=3, stride=1, padding=1, dilation=1)
    N, Ho, Wo, _ = y.shape
    y = y.reshape(N, Ho, Wo, 2, 2, cout)
    return y.transpose(0, 1, 3, 2, 4, 5).reshape(N, 2 * Ho, 2 * Wo, cout)


@jax.jit
def maxpool_3x3_s2(x):
    N, H, W, C = x.shape
    Ho = (H + 2 - 3) // 2 + 1
    Wo = (W + 2 - 3) // 2 + 1
    xp = jnp.pad(x, ((0, 0), (1, 1), (1, 1), (0, 0)), constant_values=-jnp.inf)
    taps = [xp[:, i:i + 2 * (Ho - 1) + 1:2, j:j + 2 * (Wo - 1) + 1:2, :]
            for i in range(3) for j in range(3)]
    t = jnp.stack(taps, axis=0).reshape(9, N * Ho * Wo, C)
    tr = _best_divisor(N * Ho * Wo, 2048, 8)
    out = _tapmax_call(t, tr=tr)
    return out.reshape(N, Ho, Wo, C)


@jax.jit
def avgpool_fc(h, fc_wp, fc_b):
    """nn.AvgPool2d(40) on the 40x40 stride-8 map + flatten + Linear (fused bias)."""
    N, H, W, C = h.shape
    rows = []
    for n in range(N):
        x2d = h[n].reshape(H * W, C)
        s = _colsum_call(x2d, tr=_elementwise_rows(H * W, C))
        rows.append(s[0] / float(H * W))
    t = jnp.stack(rows, axis=0)
    y, _, _ = _matmul_bias_stats(t.astype(jnp.bfloat16), fc_wp, fc_b)
    return y


# --------------------------- model (forward pass) ---------------------------

def bottleneck(x, p):
    if "ds_w" in p:
        identity = conv_bn_act(x, p["ds_w"], p["ds_g"], p["ds_b"], None,
                               kh=1, kw=1, stride=p["ds_stride"], padding=0,
                               dilation=1, relu=False)
    else:
        identity = x
    out = conv_bn_act(x, p["w1"], p["g1"], p["b1"], None,
                      kh=1, kw=1, stride=1, padding=0, dilation=1, relu=True)
    out = conv_bn_act(out, p["w2"], p["g2"], p["b2"], None,
                      kh=3, kw=3, stride=p["stride"], padding=p["dilation"],
                      dilation=p["dilation"], relu=True)
    out = conv_bn_act(out, p["w3"], p["g3"], p["b3"], identity,
                      kh=1, kw=1, stride=1, padding=0, dilation=1, relu=True)
    return out


def run_layer(x, blocks):
    for p in blocks:
        x = bottleneck(x, p)
    return x


def dilated_res_fcn_forward(params, x_nchw):
    x = jnp.transpose(x_nchw, (0, 2, 3, 1))                     # NCHW -> NHWC (once)
    e1 = conv_bn_act(x, params["stem_w"], params["stem_g"], params["stem_b"], None,
                     kh=7, kw=7, stride=2, padding=3, dilation=1, relu=True)
    e2 = maxpool_3x3_s2(e1)
    h = run_layer(e2, params["layer1"])
    e3 = run_layer(h, params["layer2"])
    h = run_layer(e3, params["layer3"])
    h = run_layer(h, params["layer4"])

    c = conv_nhwc(h, params["fc_conv_w"], None,
                  kh=1, kw=1, stride=1, padding=0, dilation=1)
    d1 = conv_transpose_k4s2p1(c, params["dec1_k3"], cout=64)
    f1 = conv_nhwc(jnp.concatenate([d1, e2], axis=-1), params["fuse1_w"],
                   params["fuse1_b"], kh=3, kw=3, stride=1, padding=1, dilation=1)
    d2 = conv_transpose_k4s2p1(f1, params["dec2_k3"], cout=64)
    f2 = conv_nhwc(jnp.concatenate([d2, e1], axis=-1), params["fuse2_w"],
                   params["fuse2_b"], kh=3, kw=3, stride=1, padding=1, dilation=1)
    d3 = conv_transpose_k4s2p1(f2, params["dec3_k3"], cout=params["num_classes"])

    t = avgpool_fc(h, params["fc_w"], params["fc_b"])
    return jnp.transpose(d3, (0, 3, 1, 2)), t                   # NHWC -> NCHW (once)


# ------------------------- deterministic parameters -------------------------

def build_subpixel_kernel(w):
    """Rewrite ConvTranspose2d(k=4,s=2,p=1) weights (Cin, Cout, 4, 4) as an exactly
    equivalent 3x3 conv with 4*Cout outputs (one per output-pixel parity)."""
    wn = np.asarray(w)
    Cin, Cout = wn.shape[0], wn.shape[1]
    taps = {0: ((0, 3), (1, 1)), 1: ((1, 2), (2, 0))}
    k3 = np.zeros((2, 2, Cout, Cin, 3, 3), np.float32)
    for ry in (0, 1):
        for rx in (0, 1):
            for dh, kh in taps[ry]:
                for dw, kw in taps[rx]:
                    k3[ry, rx, :, :, dh, dw] = wn[:, :, kh, kw].T
    return k3.reshape(4 * Cout, Cin, 3, 3)


def make_params(num_classes=5, num_room_types=11):
    keys = iter(jax.random.split(jax.random.PRNGKey(0), 512))

    def conv_w(cout, cin, kh, kw):
        fan_in = cin * kh * kw
        return jax.random.normal(next(keys), (cout, cin, kh, kw),
                                 jnp.float32) * math.sqrt(2.0 / fan_in)

    def pconv(cout, cin, kh, kw):
        return pack_conv_weight(conv_w(cout, cin, kh, kw))

    def pdec(cin, cout):
        w = jax.random.normal(next(keys), (cin, cout, 4, 4),
                              jnp.float32) * math.sqrt(2.0 / (cin * 16))
        return pack_conv_weight(jnp.asarray(build_subpixel_kernel(w)))

    def bn(c):
        return jnp.ones((c,), jnp.float32), jnp.zeros((c,), jnp.float32)

    def bottleneck_p(inplanes, planes, stride=1, dilation=1, has_ds=False, ds_stride=1):
        g1, b1 = bn(planes)
        g2, b2 = bn(planes)
        g3, b3 = bn(planes * 4)
        p = dict(w1=pconv(planes, inplanes, 1, 1), g1=g1, b1=b1,
                 w2=pconv(planes, planes, 3, 3), g2=g2, b2=b2,
                 w3=pconv(planes * 4, planes, 1, 1), g3=g3, b3=b3,
                 stride=stride, dilation=dilation)
        if has_ds:
            gd, bd = bn(planes * 4)
            p.update(ds_w=pconv(planes * 4, inplanes, 1, 1), ds_g=gd, ds_b=bd,
                     ds_stride=ds_stride)
        return p

    def make_layer(inplanes, planes, blocks, stride=1):
        layer = [bottleneck_p(inplanes, planes, stride=stride, dilation=1,
                              has_ds=(stride != 1 or inplanes != planes * 4),
                              ds_stride=stride)]
        layer += [bottleneck_p(planes * 4, planes) for _ in range(1, blocks)]
        return layer

    def make_variant_layer(inplanes, planes, blocks):
        layer = [bottleneck_p(inplanes, planes, stride=1, dilation=1,
                              has_ds=True, ds_stride=1)]
        layer += [bottleneck_p(planes * 4, planes, stride=1, dilation=2)
                  for _ in range(1, blocks)]
        return layer

    sg, sb = bn(64)
    fc_w = jax.random.normal(next(keys), (num_room_types, 2048),
                             jnp.float32) * math.sqrt(2.0 / 2048)
    params = dict(
        num_classes=num_classes,
        stem_w=pconv(64, 3, 7, 7), stem_g=sg, stem_b=sb,
        layer1=make_layer(64, 64, 3),
        layer2=make_layer(256, 128, 4, stride=2),
        layer3=make_variant_layer(512, 256, 23),
        layer4=make_variant_layer(1024, 512, 3),
        fc_conv_w=pconv(2048, 2048, 1, 1),
        dec1_k3=pdec(2048, 64),
        fuse1_w=pconv(64, 128, 3, 3),
        fuse1_b=jax.random.normal(next(keys), (64,), jnp.float32) * 0.01,
        dec2_k3=pdec(64, 64),
        fuse2_w=pconv(64, 128, 3, 3),
        fuse2_b=jax.random.normal(next(keys), (64,), jnp.float32) * 0.01,
        dec3_k3=pdec(64, num_classes),
        fc_w=jnp.transpose(fc_w).astype(jnp.bfloat16),
        fc_b=jax.random.normal(next(keys), (num_room_types,), jnp.float32) * 0.01,
    )
    return params


if __name__ == "__main__":
    # 320x320 is the smallest input consistent with AvgPool2d(40) feeding Linear(2048, 11)
    # (stride-8 dilated backbone -> 40x40 feature map).
    params = make_params()
    x = jax.random.normal(jax.random.PRNGKey(0), (1, 3, 320, 320), jnp.float32)
    d3, t = dilated_res_fcn_forward(params, x)
    jax.block_until_ready((d3, t))
    assert d3.shape == (1, 5, 320, 320) and d3.dtype == jnp.float32
    assert t.shape == (1, 11) and t.dtype == jnp.float32
    assert bool(jnp.isfinite(d3).all()) and bool(jnp.isfinite(t).all())
    print("KERNEL_OK")
</pallas_src>

<mosaic_0001>
module attributes {stable_mosaic.version = 11 : i64} {
  func.func @_mm_kernel(%arg0: i32, %arg1: i32, %arg2: i32, %arg3: memref<512x147xbf16, #tpu.memory_space<vmem>>, %arg4: memref<147x64xbf16, #tpu.memory_space<vmem>>, %arg5: memref<1x64xf32, #tpu.memory_space<vmem>>, %arg6: memref<512x64xf32, #tpu.memory_space<vmem>>, %arg7: memref<1x64xf32, #tpu.memory_space<vmem>>, %arg8: memref<1x64xf32, #tpu.memory_space<vmem>>, %arg9: memref<512x64xf32, #tpu.memory_space<vmem>>) attributes {dimension_semantics = [#tpu.dimension_semantics<parallel>, #tpu.dimension_semantics<arbitrary>, #tpu.dimension_semantics<arbitrary>], iteration_bounds = array<i64: 1, 50, 1>, scalar_prefetch = 0 : i64, scratch_operands = 1 : i64, tpu.core_type = #tpu.core_type<tc>, window_params = [{transform_indices = @transform_0, window_bounds = array<i64: 512, 147>}, {transform_indices = @transform_1, window_bounds = array<i64: 147, 64>}, {transform_indices = @transform_2, window_bounds = array<i64: 1, 64>}, {transform_indices = @transform_3, window_bounds = array<i64: 512, 64>}, {transform_indices = @transform_4, window_bounds = array<i64: 1, 64>}, {transform_indices = @transform_5, window_bounds = array<i64: 1, 64>}]} {
    %c0_i32 = arith.constant 0 : i32
    %0 = arith.cmpi eq, %arg2, %c0_i32 : i32
    %1 = arith.extui %0 : i1 to i32
    %c0_i32_0 = arith.constant 0 : i32
    %2 = arith.cmpi ne, %1, %c0_i32_0 : i32
    scf.if %2 {
      %cst_13 = arith.constant 0.000000e+00 : f32
      %17 = vector.broadcast %cst_13 : f32 to vector<512x64xf32>
      %c0_14 = arith.constant 0 : index
      %c0_15 = arith.constant 0 : index
      %18 = vector.load %arg9[%c0_14, %c0_15] : memref<512x64xf32, #tpu.memory_space<vmem>>, vector<512x64xf32>
      tpu.vector_store %arg9[%c0_14, %c0_15], %17 {strides = array<i32>} : memref<512x64xf32, #tpu.memory_space<vmem>>, vector<512x64xf32>,
    } else {
    }
    %c0_i32_1 = arith.constant 0 : i32
    %3 = arith.cmpi eq, %arg1, %c0_i32_1 : i32
    %c0_i32_2 = arith.constant 0 : i32
    %4 = arith.cmpi eq, %arg2, %c0_i32_2 : i32
    %5 = arith.andi %3, %4 : i1
    %6 = arith.extui %5 : i1 to i32
    %c0_i32_3 = arith.constant 0 : i32
    %7 = arith.cmpi ne, %6, %c0_i32_3 : i32
    scf.if %7 {
      %cst_13 = arith.constant 0.000000e+00 : f32
      %17 = vector.broadcast %cst_13 : f32 to vector<1x64xf32>
      %c0_14 = arith.constant 0 : index
      %c0_15 = arith.constant 0 : index
      %18 = vector.load %arg7[%c0_14, %c0_15] : memref<1x64xf32, #tpu.memory_space<vmem>>, vector<1x64xf32>
      tpu.vector_store %arg7[%c0_14, %c0_15], %17 {strides = array<i32>} : memref<1x64xf32, #tpu.memory_space<vmem>>, vector<1x64xf32>,
      %cst_16 = arith.constant 0.000000e+00 : f32
      %19 = vector.broadcast %cst_16 : f32 to vector<1x64xf32>
      %c0_17 = arith.constant 0 : index
      %c0_18 = arith.constant 0 : index
      %20 = vector.load %arg8[%c0_17, %c0_18] : memref<1x64xf32, #tpu.memory_space<vmem>>, vector<1x64xf32>
      tpu.vector_store %arg8[%c0_17, %c0_18], %19 {strides = array<i32>} : memref<1x64xf32, #tpu.memory_space<vmem>>, vector<1x64xf32>,
    } else {
    }
    %c0 = arith.constant 0 : index
    %c0_4 = arith.constant 0 : index
    %8 = vector.load %arg9[%c0, %c0_4] : memref<512x64xf32, #tpu.memory_space<vmem>>, vector<512x64xf32>
    %c0_5 = arith.constant 0 : index
    %c0_6 = arith.constant 0 : index
    %9 = vector.load %arg3[%c0_5, %c0_6] : memref<512x147xbf16, #tpu.memory_space<vmem>>, vector<512x147xbf16>
    %c0_7 = arith.constant 0 : index
    %c0_8 = arith.constant 0 : index
    %10 = vector.load %arg4[%c0_7, %c0_8] : memref<147x64xbf16, #tpu.memory_space<vmem>>, vector<147x64xbf16>
    %cst = arith.constant dense<0.000000e+00> : vector<512x64xf32>
    %11 = tpu.matmul %9, %10, %cst {dimension_numbers = #tpu.dot_dimension_numbers<[1], [0], [0], [1], [0, 0, 1, 1], [], []>} : vector<512x147xbf16>, vector<147x64xbf16>, vector<512x64xf32> -> vector<512x64xf32>
    %12 = arith.addf %8, %11 : vector<512x64xf32>
    %c0_9 = arith.constant 0 : index
    %c0_10 = arith.constant 0 : index
    %13 = vector.load %arg9[%c0_9, %c0_10] : memref<512x64xf32, #tpu.memory_space<vmem>>, vector<512x64xf32>
    tpu.vector_store %arg9[%c0_9, %c0_10], %12 {strides = array<i32>} : memref<512x64xf32, #tpu.memory_space<vmem>>, vector<512x64xf32>,
    %c0_i32_11 = arith.constant 0 : i32
    %14 = arith.cmpi eq, %arg2, %c0_i32_11 : i32
    %15 = arith.extui %14 : i1 to i32
    %c0_i32_12 = arith.constant 0 : i32
    %16 = arith.cmpi ne, %15, %c0_i32_12 : i32
    scf.if %16 {
      %c0_13 = arith.constant 0 : index
      %c0_14 = arith.constant 0 : index
      %17 = vector.load %arg9[%c0_13, %c0_14] : memref<512x64xf32, #tpu.memory_space<vmem>>, vector<512x64xf32>
      %c0_15 = arith.constant 0 : index
      %c0_16 = arith.constant 0 : index
      %18 = vector.load %arg5[%c0_15, %c0_16] : memref<1x64xf32, #tpu.memory_space<vmem>>, vector<1x64xf32>
      %19 = vector.broadcast %18 : vector<1x64xf32> to vector<512x64xf32>
      %20 = arith.addf %17, %19 : vector<512x64xf32>
      %c0_17 = arith.constant 0 : index
      %c0_18 = arith.constant 0 : index
      %21 = vector.load %arg6[%c0_17, %c0_18] : memref<512x64xf32, #tpu.memory_space<vmem>>, vector<512x64xf32>
      tpu.vector_store %arg6[%c0_17, %c0_18], %20 {strides = array<i32>} : memref<512x64xf32, #tpu.memory_space<vmem>>, vector<512x64xf32>,
      %c0_19 = arith.constant 0 : index
      %c0_20 = arith.constant 0 : index
      %22 = vector.load %arg7[%c0_19, %c0_20] : memref<1x64xf32, #tpu.memory_space<vmem>>, vector<1x64xf32>
      %cst_21 = arith.constant dense<0.000000e+00> : vector<64xf32>
      %23 = vector.multi_reduction <add>, %20, %cst_21 [0] : vector<512x64xf32> to vector<64xf32>
      %24 = vector.shape_cast %23 : vector<64xf32> to vector<1x64xf32>
      %25 = arith.addf %22, %24 : vector<1x64xf32>
      %c0_22 = arith.constant 0 : index
      %c0_23 = arith.constant 0 : index
      %26 = vector.load %arg7[%c0_22, %c0_23] : memref<1x64xf32, #tpu.memory_space<vmem>>, vector<1x64xf32>
      tpu.vector_store %arg7[%c0_22, %c0_23], %25 {strides = array<i32>} : memref<1x64xf32, #tpu.memory_space<vmem>>, vector<1x64xf32>,
      %c0_24 = arith.constant 0 : index
      %c0_25 = arith.constant 0 : index
      %27 = vector.load %arg8[%c0_24, %c0_25] : memref<1x64xf32, #tpu.memory_space<vmem>>, vector<1x64xf32>
      %28 = arith.mulf %20, %20 : vector<512x64xf32>
      %cst_26 = arith.constant dense<0.000000e+00> : vector<64xf32>
      %29 = vector.multi_reduction <add>, %28, %cst_26 [0] : vector<512x64xf32> to vector<64xf32>
      %30 = vector.shape_cast %29 : vector<64xf32> to vector<1x64xf32>
      %31 = arith.addf %27, %30 : vector<1x64xf32>
      %c0_27 = arith.constant 0 : index
      %c0_28 = arith.constant 0 : index
      %32 = vector.load %arg8[%c0_27, %c0_28] : memref<1x64xf32, #tpu.memory_space<vmem>>, vector<1x64xf32>
      tpu.vector_store %arg8[%c0_27, %c0_28], %31 {strides = array<i32>} : memref<1x64xf32, #tpu.memory_space<vmem>>, vector<1x64xf32>,
    } else {
    }
    return
  }
  func.func @transform_0(%arg0: i32, %arg1: i32, %arg2: i32) -> (i32, i32) {
    %c0_i32 = arith.constant 0 : i32
    return %arg1, %arg2 : i32, i32
  }
  func.func @transform_1(%arg0: i32, %arg1: i32, %arg2: i32) -> (i32, i32) {
    %c0_i32 = arith.constant 0 : i32
    return %arg2, %arg0 : i32, i32
  }
  func.func @transform_2(%arg0: i32, %arg1: i32, %arg2: i32) -> (i32, i32) {
    %c0_i32 = arith.constant 0 : i32
    %c0_i32_0 = arith.constant 0 : i32
    return %c0_i32, %arg0 : i32, i32
  }
  func.func @transform_3(%arg0: i32, %arg1: i32, %arg2: i32) -> (i32, i32) {
    %c0_i32 = arith.constant 0 : i32
    return %arg1, %arg0 : i32, i32
  }
  func.func @transform_4(%arg0: i32, %arg1: i32, %arg2: i32) -> (i32, i32) {
    %c0_i32 = arith.constant 0 : i32
    %c0_i32_0 = arith.constant 0 : i32
    return %c0_i32, %arg0 : i32, i32
  }
  func.func @transform_5(%arg0: i32, %arg1: i32, %arg2: i32) -> (i32, i32) {
    %c0_i32 = arith.constant 0 : i32
    %c0_i32_0 = arith.constant 0 : i32
    return %c0_i32, %arg0 : i32, i32
  }
}

</mosaic_0001>

<llo_original>
// kernel: _mm_call.1
$region0: #{_mm_call.1}
  #allocation0 [shape = 'u32[]', space=smem, size = 0x4, offset = 0x4, fixed_abs, tag = 'smem constant byte address 0x4 - core index']
  #allocation1 [shape = 'u32[144,128]{1,0:T(1,128)}', space=vmem, size = 0x12000, scoped, tag = 'internal scratch']
  #allocation2 [shape = 'f32[512,64]{1,0:T(8,128)}', space=vmem, size = 0x40000, scoped, tag = 'scratch operand']
  %s0 = inlined_call_operand.vmem [shape: bf16[25600,147], index: 0, kind: input, shape index: {}]
  %s1 = inlined_call_operand.vmem [shape: bf16[147,64], index: 1, kind: input, shape index: {}]
  %s2 = inlined_call_operand.vmem [shape: f32[1,64], index: 2, kind: input, shape index: {}]
  %s3 = inlined_call_operand.vmem [shape: f32[25600,64], index: 3, kind: output, shape index: {0}]
  %s4 = inlined_call_operand.hbm [shape: f32[1,64], index: 4, kind: output, shape index: {1}]
  %s5 = inlined_call_operand.hbm [shape: f32[1,64], index: 5, kind: output, shape index: {2}]
  %6 = xla_tuple %s3, %s4, %s5
  %s7 = sld [smem:[#allocation0]]
  $region73: #{_mm_call.1} parent=0
    _
  %s9 = ssub.s32 1, %s7
  %s10 = scalar_select 0, %s9, %s7
  $region1: #{_mm_call.1} parent=0
    #allocation3 [shape = 'u8[512]{0}', space=vmem, size = 0x400, scoped, tag = 'output window, operand 1, single buffered']
    #allocation4 [shape = 's32[2]{0}', space=sflag, size = 0x8, scoped, tag = 'scoped memory for _mm_call.1']
    #allocation5 [shape = 'u8[512]{0}', space=vmem, size = 0x400, scoped, tag = 'output window, operand 2, single buffered']
    #allocation6 [shape = 's32[1]{0}', space=sflag, size = 0x4, scoped, tag = 'scoped memory for _mm_call.1']
    %11 = vsyncpa [#allocation4], 0
    %12 = vsyncpa [#allocation6], 0
    loop: start=0, step=1, limit=52
    $region2: #{_mm_call.1} parent=1 // loop_pre_header
      _
    $region3: #{_mm_call.1} parent=1 // loop_header
      %s14 = sphi 0, %s18
      %p15 = scmp.ge.s32.totalorder %s14, 52
      %s21 = sphi 0, %s40
      %s22 = sphi 0, %s36
      %s23 = sphi 0, %s32
      %s24 = sphi 0, %s21
      %s25 = sphi 0, %s22
      %s26 = sphi 0, %s23
      %s27 = sphi 0, %s24
      %s28 = sphi 0, %s25
      %s29 = sphi 0, %s26
      %s45 = sphi 0, %s47
      %s48 = sphi 0, %s45
      %s49 = sphi 0, %s48
      %s65 = sphi 0, %s49
      %s73 = sphi 0, %s75
      %s76 = sphi 0, %s73
      %s77 = sphi 0, %s76
      %s93 = sphi 0, %s77
      %s99 = sphi 0, %s101
      %s102 = sphi 0, %s99
      %s103 = sphi 0, %s102
      %s119 = sphi 0, %s103
      %s127 = sphi 0, %s129
      %s130 = sphi 0, %s127
      %s131 = sphi 0, %s130
      %s147 = sphi 0, %s131
      %s153 = sphi 0, %s155
      %s156 = sphi 0, %s153
      %s157 = sphi 0, %s156
      %s173 = sphi 0, %s157
      %s179 = sphi 0, %s181
      %s182 = sphi 0, %s179
      %s183 = sphi 0, %s182
      %s199 = sphi 0, %s183
    $region4: #{_mm_call.1} parent=1 // loop_header_branch
      %17 = sbr.rel (%p15) target = $region8
    $region5: #{_mm_call.1} parent=1 // loop_body
      %s19 = ssub.s32 %s14, 1
      %s20 = ssub.s32 %s14, 2
      %s30 = sadd.s32 1, %s23
      %p31 = scmp.ge.s32.totalorder %s30, 1
      %s32 = scalar_select %p31, 0, %s30
      %s33 = sadd.s32 1, %s22
      %s34 = scalar_select %p31, %s33, %s22
      %p35 = scmp.ge.s32.totalorder %s34, 50
      %s36 = scalar_select %p35, 0, %s34
      %s37 = sadd.s32 1, %s21
      %s38 = scalar_select %p35, %s37, %s21
      %p39 = scmp.ge.s32.totalorder %s38, 1
      %s40 = scalar_select %p39, 0, %s38
      %s41 = ssub.s32 %s22, %s36
      %s42 = ssub.s32 %s23, %s32
      %s43 = sor.u32 %s41, %s42
      %p44 = scmp.eq.s32.totalorder %s43, 0
      %s46 = sadd.s32 %s45, 1
      %s47 = scalar_select %p44, %s45, %s46
      %p50 = pneg %p44
      %p51 = scmp.eq.s32.totalorder %s14, 49
      %p52 = por %p50, %p51
      %p53 = scmp.ne.s32.totalorder %s45, %s48
      %p54 = scmp.eq.s32.totalorder %s14, 0
      %p55 = por %p53, %p54
      %p56 = scmp.ne.s32.totalorder %s45, %s48
      %p57 = scmp.eq.s32.totalorder %s19, 49
      %p58 = por %p56, %p57
      %p59 = scmp.ne.s32.totalorder %s48, %s49
      %p60 = scmp.eq.s32.totalorder %s19, 0
      %p61 = por %p59, %p60
      %p62 = scmp.ne.s32.totalorder %s48, %s49
      %p63 = scmp.eq.s32.totalorder %s20, 49
      %p64 = por %p62, %p63
      %p66 = scmp.ne.s32.totalorder %s49, %s65
      %p67 = scmp.eq.s32.totalorder %s20, 0
      %p68 = por %p66, %p67
      %s69 = ssub.s32 %s23, %s32
      %s70 = ssub.s32 %s21, %s40
      %s71 = sor.u32 %s69, %s70
      %p72 = scmp.eq.s32.totalorder %s71, 0
      %s74 = sadd.s32 %s73, 1
      %s75 = scalar_select %p72, %s73, %s74
      %p78 = pneg %p72
      %p79 = scmp.eq.s32.totalorder %s14, 49
      %p80 = por %p78, %p79
      %p81 = scmp.ne.s32.totalorder %s73, %s76
      %p82 = scmp.eq.s32.totalorder %s14, 0
      %p83 = por %p81, %p82
      %p84 = scmp.ne.s32.totalorder %s73, %s76
      %p85 = scmp.eq.s32.totalorder %s19, 49
      %p86 = por %p84, %p85
      %p87 = scmp.ne.s32.totalorder %s76, %s77
      %p88 = scmp.eq.s32.totalorder %s19, 0
      %p89 = por %p87, %p88
      %p90 = scmp.ne.s32.totalorder %s76, %s77
      %p91 = scmp.eq.s32.totalorder %s20, 49
      %p92 = por %p90, %p91
      %p94 = scmp.ne.s32.totalorder %s77, %s93
      %p95 = scmp.eq.s32.totalorder %s20, 0
      %p96 = por %p94, %p95
      %s97 = ssub.s32 %s21, %s40
      %p98 = scmp.eq.s32.totalorder %s97, 0
      %s100 = sadd.s32 %s99, 1
      %s101 = scalar_select %p98, %s99, %s100
      %p104 = pneg %p98
      %p105 = scmp.eq.s32.totalorder %s14, 49
      %p106 = por %p104, %p105
      %p107 = scmp.ne.s32.totalorder %s99, %s102
      %p108 = scmp.eq.s32.totalorder %s14, 0
      %p109 = por %p107, %p108
      %p110 = scmp.ne.s32.totalorder %s99, %s102
      %p111 = scmp.eq.s32.totalorder %s19, 49
      %p112 = por %p110, %p111
      %p113 = scmp.ne.s32.totalorder %s102, %s103
      %p114 = scmp.eq.s32.totalorder %s19, 0
      %p115 = por %p113, %p114
      %p116 = scmp.ne.s32.totalorder %s102, %s103
      %p117 = scmp.eq.s32.totalorder %s20, 49
      %p118 = por %p116, %p117
      %p120 = scmp.ne.s32.totalorder %s103, %s119
      %p121 = scmp.eq.s32.totalorder %s20, 0
      %p122 = por %p120, %p121
      %s123 = ssub.s32 %s22, %s36
      %s124 = ssub.s32 %s21, %s40
      %s125 = sor.u32 %s123, %s124
      %p126 = scmp.eq.s32.totalorder %s125, 0
      %s128 = sadd.s32 %s127, 1
      %s129 = scalar_select %p126, %s127, %s128
      %p132 = pneg %p126
      %p133 = scmp.eq.s32.totalorder %s14, 49
      %p134 = por %p132, %p133
      %p135 = scmp.ne.s32.totalorder %s127, %s130
      %p136 = scmp.eq.s32.totalorder %s14, 0
      %p137 = por %p135, %p136
      %p138 = scmp.ne.s32.totalorder %s127, %s130
      %p139 = scmp.eq.s32.totalorder %s19, 49
      %p140 = por %p138, %p139
      %p141 = scmp.ne.s32.totalorder %s130, %s131
      %p142 = scmp.eq.s32.totalorder %s19, 0
      %p143 = por %p141, %p142
      %p144 = scmp.ne.s32.totalorder %s130, %s131
      %p145 = scmp.eq.s32.totalorder %s20, 49
      %p146 = por %p144, %p145
      %p148 = scmp.ne.s32.totalorder %s131, %s147
      %p149 = scmp.eq.s32.totalorder %s20, 0
      %p150 = por %p148, %p149
      %s151 = ssub.s32 %s21, %s40
      %p152 = scmp.eq.s32.totalorder %s151, 0
      %s154 = sadd.s32 %s153, 1
      %s155 = scalar_select %p152, %s153, %s154
      %p158 = pneg %p152
      %p159 = scmp.eq.s32.totalorder %s14, 49
      %p160 = por %p158, %p159
      %p161 = scmp.ne.s32.totalorder %s153, %s156
      %p162 = scmp.eq.s32.totalorder %s14, 0
      %p163 = por %p161, %p162
      %p164 = scmp.ne.s32.totalorder %s153, %s156
      %p165 = scmp.eq.s32.totalorder %s19, 49
      %p166 = por %p164, %p165
      %p167 = scmp.ne.s32.totalorder %s156, %s157
      %p168 = scmp.eq.s32.totalorder %s19, 0
      %p169 = por %p167, %p168
      %p170 = scmp.ne.s32.totalorder %s156, %s157
      %p171 = scmp.eq.s32.totalorder %s20, 49
      %p172 = por %p170, %p171
      %p174 = scmp.ne.s32.totalorder %s157, %s173
      %p175 = scmp.eq.s32.totalorder %s20, 0
      %p176 = por %p174, %p175
      %s177 = ssub.s32 %s21, %s40
      %p178 = scmp.eq.s32.totalorder %s177, 0
      %s180 = sadd.s32 %s179, 1
      %s181 = scalar_select %p178, %s179, %s180
      %p184 = pneg %p178
      %p185 = scmp.eq.s32.totalorder %s14, 49
      %p186 = por %p184, %p185
      %p187 = scmp.ne.s32.totalorder %s179, %s182
      %p188 = scmp.eq.s32.totalorder %s14, 0
      %p189 = por %p187, %p188
      %p190 = scmp.ne.s32.totalorder %s179, %s182
      %p191 = scmp.eq.s32.totalorder %s19, 49
      %p192 = por %p190, %p191
      %p193 = scmp.ne.s32.totalorder %s182, %s183
      %p194 = scmp.eq.s32.totalorder %s19, 0
      %p195 = por %p193, %p194
      %p196 = scmp.ne.s32.totalorder %s182, %s183
      %p197 = scmp.eq.s32.totalorder %s20, 49
      %p198 = por %p196, %p197
      %p200 = scmp.ne.s32.totalorder %s183, %s199
      %p201 = scmp.eq.s32.totalorder %s20, 0
      %p202 = por %p200, %p201
      %p203 = scmp.le.s32.totalorder 1, %s14
      %p204 = scmp.lt.s32.totalorder %s14, 51
      %p205 = pnand %p203, %p204
      %p206 = pneg %p205
      // Predicated region
      $region9: #{_mm_call.1} parent=5 // pred_check
        _
      $region10: #{_mm_call.1} parent=5 // pred_check_branch
        %208 = sbr.rel (%p205) target = $region12
      $region11: #{_mm_call.1} parent=5 // pred_region
        %s209 = ssub.s32 %s14, 1
        // Predicated region
        $region13: #{_mm_call.1} parent=11 // pred_check
          %p210 = pneg %p89
        $region14: #{_mm_call.1} parent=11 // pred_check_branch
          %212 = sbr.rel (%p210) target = $region16
        $region15: #{_mm_call.1} parent=11 // pred_region
          %s213 = smul.u32 19, %s26
          %p214 = scmp.lt.s32.totalorder %s213, 18
          %s215 = scalar_select %p214, %s213, 18
          %p216 = scmp.lt.s32.totalorder %s24, 0
          %s217 = scalar_select %p216, %s24, 0
          %s218 = sadd.s32 %s217, %s215
          %s219 = smul.addr %s218, 4
          %s220 = scalar_lea.vmem %s1, %s219
          %s221 = smul.u32 19, %s26
        $region16: #{_mm_call.1} parent=11 // pred_fallthru
          _
        // Predicated region
        $region17: #{_mm_call.1} parent=11 // pred_check
          %p222 = pneg %p115
        $region18: #{_mm_call.1} parent=11 // pred_check_branch
          %224 = sbr.rel (%p222) target = $region20
        $region19: #{_mm_call.1} parent=11 // pred_region
          %p225 = scmp.lt.s32.totalorder %s24, 0
          %s226 = scalar_select %p225, %s24, 0
          %s227 = scalar_lea.vmem %s2, %s226
        $region20: #{_mm_call.1} parent=11 // pred_fallthru
          _
      $region12: #{_mm_call.1} parent=5 // pred_fallthru
        _
      %p228 = scmp.lt.s32.totalorder %s14, 50
      // Predicated region
      $region21: #{_mm_call.1} parent=5 // pred_check
        %p229 = pneg %p228
      $region22: #{_mm_call.1} parent=5 // pred_check_branch
        %231 = sbr.rel (%p229) target = $region24
      $region23: #{_mm_call.1} parent=5 // pred_region
        // Predicated region
        $region25: #{_mm_call.1} parent=23 // pred_check
          %p232 = pneg %p55
        $region26: #{_mm_call.1} parent=23 // pred_check_branch
          %234 = sbr.rel (%p232) target = $region28
        $region27: #{_mm_call.1} parent=23 // pred_region
          %s235 = smul.u32 64, %s22
          %s236 = smul.u32 2, %s23
          %p237 = scmp.lt.s32.totalorder %s235, 3199
          %s238 = scalar_select %p237, %s235, 3199
          %p239 = scmp.lt.s32.totalorder %s236, 1
          %s240 = scalar_select %p239, %s236, 1
          %s241 = smul.addr %s238, 2
          %s242 = sadd.s32 %s240, %s241
          %s243 = smul.addr %s242, 4
          %s244 = scalar_lea.vmem %s0, %s243
          %s245 = smul.u32 64, %s22
          %s246 = smul.u32 2, %s23
        $region28: #{_mm_call.1} parent=23 // pred_fallthru
          _
      $region24: #{_mm_call.1} parent=5 // pred_fallthru
        _
      %p247 = scmp.le.s32.totalorder 1, %s14
      %p248 = scmp.lt.s32.totalorder %s14, 51
      %p249 = pnand %p247, %p248
      %p250 = pneg %p249
      // Predicated region
      $region29: #{_mm_call.1} parent=5 // pred_check
        _
      $region30: #{_mm_call.1} parent=5 // pred_check_branch
        %252 = sbr.rel (%p249) target = $region32
      $region31: #{_mm_call.1} parent=5 // pred_region
        %s253 = ssub.s32 %s14, 1
        %s254 = smul.u32 64, %s25
        %s255 = smul.u32 2, %s26
        %p256 = scmp.lt.s32.totalorder %s254, 3199
        %s257 = scalar_select %p256, %s254, 3199
        %p258 = scmp.lt.s32.totalorder %s255, 1
        %s259 = scalar_select %p258, %s255, 1
        %s260 = smul.addr %s257, 2
        %s261 = sadd.s32 %s259, %s260
        %s262 = smul.addr %s261, 4
        %s263 = scalar_lea.vmem %s0, %s262
        %p264 = pneg %p61
        %p265 = pneg %p58
        %s266 = smul.u32 19, %s26
        %p267 = scmp.lt.s32.totalorder %s266, 18
        %s268 = scalar_select %p267, %s266, 18
        %p269 = scmp.lt.s32.totalorder %s24, 0
        %s270 = scalar_select %p269, %s24, 0
        %s271 = sadd.s32 %s270, %s268
        %s272 = smul.addr %s271, 4
        %s273 = scalar_lea.vmem %s1, %s272
        %p274 = pneg %p89
        %p275 = pneg %p86
        %p276 = scmp.lt.s32.totalorder %s24, 0
        %s277 = scalar_select %p276, %s24, 0
        %s278 = scalar_lea.vmem %s2, %s277
        %p279 = pneg %p115
        %p280 = pneg %p112
        %p281 = pneg %p143
        %p282 = pneg %p140
        %s283 = smul.u32 64, %s25
        %p284 = scmp.lt.s32.totalorder %s283, 3199
        %s285 = scalar_select %p284, %s283, 3199
        %p286 = scmp.lt.s32.totalorder %s24, 0
        %s287 = scalar_select %p286, %s24, 0
        %s288 = sadd.s32 %s287, %s285
        %s289 = smul.addr %s288, 8
        %s290 = scalar_lea.vmem %s3, %s289
        %p291 = pneg %p169
        %p292 = pneg %p166
        %p293 = pneg %p195
        %p294 = pneg %p192
        %s295 = smul.u32 64, %s25
        %s296 = smul.u32 2, %s26
        %p297 = scmp.lt.s32.totalorder %s295, 3199
        %s298 = scalar_select %p297, %s295, 3199
        %p299 = scmp.lt.s32.totalorder %s296, 1
        %s300 = scalar_select %p299, %s296, 1
        %s301 = smul.addr %s298, 2
        %s302 = sadd.s32 %s300, %s301
        %s303 = smul.addr %s302, 4
        %s304 = scalar_lea.vmem %s0, %s303
        %s305 = smul.u32 64, %s25
        %s306 = smul.u32 2, %s26
        %s307 = smul.u32 19, %s26
        %p308 = scmp.lt.s32.totalorder %s307, 18
        %s309 = scalar_select %p308, %s307, 18
        %p310 = scmp.lt.s32.totalorder %s24, 0
        %s311 = scalar_select %p310, %s24, 0
        %s312 = sadd.s32 %s311, %s309
        %s313 = smul.addr %s312, 4
        %s314 = scalar_lea.vmem %s1, %s313
        %s315 = smul.u32 19, %s26
        %p316 = scmp.lt.s32.totalorder %s24, 0
        %s317 = scalar_select %p316, %s24, 0
        %s318 = scalar_lea.vmem %s2, %s317
        %s319 = smul.u32 64, %s25
        %p320 = scmp.lt.s32.totalorder %s319, 3199
        %s321 = scalar_select %p320, %s319, 3199
        %p322 = scmp.lt.s32.totalorder %s24, 0
        %s323 = scalar_select %p322, %s24, 0
        %s324 = sadd.s32 %s323, %s321
        %s325 = smul.addr %s324, 8
        %s326 = scalar_lea.vmem %s3, %s325
        %s327 = smul.u32 64, %s25
        %p329 = scmp.eq.s32.totalorder %s26, 0
        // Predicated region
        $region33: #{_mm_call.1} parent=31 // pred_check
          %p330 = pneg %p329
        $region34: #{_mm_call.1} parent=31 // pred_check_branch
          %332 = sbr.rel (%p330) target = $region36
        $region35: #{_mm_call.1} parent=31 // pred_region
          %vm333 = vcmask 523264
          %334 = vst.msk [vmem:[#allocation2] sm:$0xff] %vm333, 0.0
          %335 = vst.msk [vmem:[#allocation2 + $0x8] sm:$0xff] %vm333, 0.0
          %336 = vst.msk [vmem:[#allocation2 + $0x10] sm:$0xff] %vm333, 0.0
          %337 = vst.msk [vmem:[#allocation2 + $0x18] sm:$0xff] %vm333, 0.0
          %338 = vst.msk [vmem:[#allocation2 + $0x20] sm:$0xff] %vm333, 0.0
          %339 = vst.msk [vmem:[#allocation2 + $0x28] sm:$0xff] %vm333, 0.0
          %340 = vst.msk [vmem:[#allocation2 + $0x30] sm:$0xff] %vm333, 0.0
          %341 = vst.msk [vmem:[#allocation2 + $0x38] sm:$0xff] %vm333, 0.0
          %342 = vst.msk [vmem:[#allocation2 + $0x40] sm:$0xff] %vm333, 0.0
          %343 = vst.msk [vmem:[#allocation2 + $0x48] sm:$0xff] %vm333, 0.0
          %344 = vst.msk [vmem:[#allocation2 + $0x50] sm:$0xff] %vm333, 0.0
          %345 = vst.msk [vmem:[#allocation2 + $0x58] sm:$0xff] %vm333, 0.0
          %346 = vst.msk [vmem:[#allocation2 + $0x60] sm:$0xff] %vm333, 0.0
          %347 = vst.msk [vmem:[#allocation2 + $0x68] sm:$0xff] %vm333, 0.0
          %348 = vst.msk [vmem:[#allocation2 + $0x70] sm:$0xff] %vm333, 0.0
          %349 = vst.msk [vmem:[#allocation2 + $0x78] sm:$0xff] %vm333, 0.0
          %350 = vst.msk [vmem:[#allocation2 + $0x80] sm:$0xff] %vm333, 0.0
          %351 = vst.msk [vmem:[#allocation2 + $0x88] sm:$0xff] %vm333, 0.0
          %352 = vst.msk [vmem:[#allocation2 + $0x90] sm:$0xff] %vm333, 0.0
          %353 = vst.msk [vmem:[#allocation2 + $0x98] sm:$0xff] %vm333, 0.0
          %354 = vst.msk [vmem:[#allocation2 + $0xa0] sm:$0xff] %vm333, 0.0
          %355 = vst.msk [vmem:[#allocation2 + $0xa8] sm:$0xff] %vm333, 0.0
          %356 = vst.msk [vmem:[#allocation2 + $0xb0] sm:$0xff] %vm333, 0.0
          %357 = vst.msk [vmem:[#allocation2 + $0xb8] sm:$0xff] %vm333, 0.0
          %358 = vst.msk [vmem:[#allocation2 + $0xc0] sm:$0xff] %vm333, 0.0
          %359 = vst.msk [vmem:[#allocation2 + $0xc8] sm:$0xff] %vm333, 0.0
          %360 = vst.msk [vmem:[#allocation2 + $0xd0] sm:$0xff] %vm333, 0.0
          %361 = vst.msk [vmem:[#allocation2 + $0xd8] sm:$0xff] %vm333, 0.0
          %362 = vst.msk [vmem:[#allocation2 + $0xe0] sm:$0xff] %vm333, 0.0
          %363 = vst.msk [vmem:[#allocation2 + $0xe8] sm:$0xff] %vm333, 0.0
          %364 = vst.msk [vmem:[#allocation2 + $0xf0] sm:$0xff] %vm333, 0.0
          %365 = vst.msk [vmem:[#allocation2 + $0xf8] sm:$0xff] %vm333, 0.0
          %366 = vst.msk [vmem:[#allocation2 + $0x100] sm:$0xff] %vm333, 0.0
          %367 = vst.msk [vmem:[#allocation2 + $0x108] sm:$0xff] %vm333, 0.0
          %368 = vst.msk [vmem:[#allocation2 + $0x110] sm:$0xff] %vm333, 0.0
          %369 = vst.msk [vmem:[#allocation2 + $0x118] sm:$0xff] %vm333, 0.0
          %370 = vst.msk [vmem:[#allocation2 + $0x120] sm:$0xff] %vm333, 0.0
          %371 = vst.msk [vmem:[#allocation2 + $0x128] sm:$0xff] %vm333, 0.0
          %372 = vst.msk [vmem:[#allocation2 + $0x130] sm:$0xff] %vm333, 0.0
          %373 = vst.msk [vmem:[#allocation2 + $0x138] sm:$0xff] %vm333, 0.0
          %374 = vst.msk [vmem:[#allocation2 + $0x140] sm:$0xff] %vm333, 0.0
          %375 = vst.msk [vmem:[#allocation2 + $0x148] sm:$0xff] %vm333, 0.0
          %376 = vst.msk [vmem:[#allocation2 + $0x150] sm:$0xff] %vm333, 0.0
          %377 = vst.msk [vmem:[#allocation2 + $0x158] sm:$0xff] %vm333, 0.0
          %378 = vst.msk [vmem:[#allocation2 + $0x160] sm:$0xff] %vm333, 0.0
          %379 = vst.msk [vmem:[#allocation2 + $0x168] sm:$0xff] %vm333, 0.0
          %380 = vst.msk [vmem:[#allocation2 + $0x170] sm:$0xff] %vm333, 0.0
          %381 = vst.msk [vmem:[#allocation2 + $0x178] sm:$0xff] %vm333, 0.0
          %382 = vst.msk [vmem:[#allocation2 + $0x180] sm:$0xff] %vm333, 0.0
          %383 = vst.msk [vmem:[#allocation2 + $0x188] sm:$0xff] %vm333, 0.0
          %384 = vst.msk [vmem:[#allocation2 + $0x190] sm:$0xff] %vm333, 0.0
          %385 = vst.msk [vmem:[#allocation2 + $0x198] sm:$0xff] %vm333, 0.0
          %386 = vst.msk [vmem:[#allocation2 + $0x1a0] sm:$0xff] %vm333, 0.0
          %387 = vst.msk [vmem:[#allocation2 + $0x1a8] sm:$0xff] %vm333, 0.0
          %388 = vst.msk [vmem:[#allocation2 + $0x1b0] sm:$0xff] %vm333, 0.0
          %389 = vst.msk [vmem:[#allocation2 + $0x1b8] sm:$0xff] %vm333, 0.0
          %390 = vst.msk [vmem:[#allocation2 + $0x1c0] sm:$0xff] %vm333, 0.0
          %391 = vst.msk [vmem:[#allocation2 + $0x1c8] sm:$0xff] %vm333, 0.0
          %392 = vst.msk [vmem:[#allocation2 + $0x1d0] sm:$0xff] %vm333, 0.0
          %393 = vst.msk [vmem:[#allocation2 + $0x1d8] sm:$0xff] %vm333, 0.0
          %394 = vst.msk [vmem:[#allocation2 + $0x1e0] sm:$0xff] %vm333, 0.0
          %395 = vst.msk [vmem:[#allocation2 + $0x1e8] sm:$0xff] %vm333, 0.0
          %396 = vst.msk [vmem:[#allocation2 + $0x1f0] sm:$0xff] %vm333, 0.0
          %397 = vst.msk [vmem:[#allocation2 + $0x1f8] sm:$0xff] %vm333, 0.0
        $region36: #{_mm_call.1} parent=31 // pred_fallthru
          _
        %p398 = scmp.eq.s32.totalorder %s25, 0
        %p399 = pnand %p398, %p329
        %p400 = pneg %p399
        // Predicated region
        $region37: #{_mm_call.1} parent=31 // pred_check
          _
        $region38: #{_mm_call.1} parent=31 // pred_check_branch
          %402 = sbr.rel (%p399) target = $region40
        $region39: #{_mm_call.1} parent=31 // pred_region
          %vm403 = vcmask 516096
          %404 = vst.msk [vmem:[#allocation3] sm:$0x1] %vm403, 0.0
          %405 = vst.msk [vmem:[#allocation5] sm:$0x1] %vm403, 0.0
        $region40: #{_mm_call.1} parent=31 // pred_fallthru
          _
        %v406 = vld [vmem:[#allocation2] sm:$0xff]
        %v407 = vld [vmem:[#allocation2 + $0x8] sm:$0xff]
        %v408 = vld [vmem:[#allocation2 + $0x10] sm:$0xff]
        %v409 = vld [vmem:[#allocation2 + $0x18] sm:$0xff]
        %v410 = vld [vmem:[#allocation2 + $0x20] sm:$0xff]
        %v411 = vld [vmem:[#allocation2 + $0x28] sm:$0xff]
        %v412 = vld [vmem:[#allocation2 + $0x30] sm:$0xff]
        %v413 = vld [vmem:[#allocation2 + $0x38] sm:$0xff]
        %v414 = vld [vmem:[#allocation2 + $0x40] sm:$0xff]
        %v415 = vld [vmem:[#allocation2 + $0x48] sm:$0xff]
        %v416 = vld [vmem:[#allocation2 + $0x50] sm:$0xff]
        %v417 = vld [vmem:[#allocation2 + $0x58] sm:$0xff]
        %v418 = vld [vmem:[#allocation2 + $0x60] sm:$0xff]
        %v419 = vld [vmem:[#allocation2 + $0x68] sm:$0xff]
        %v420 = vld [vmem:[#allocation2 + $0x70] sm:$0xff]
        %v421 = vld [vmem:[#allocation2 + $0x78] sm:$0xff]
        %v422 = vld [vmem:[#allocation2 + $0x80] sm:$0xff]
        %v423 = vld [vmem:[#allocation2 + $0x88] sm:$0xff]
        %v424 = vld [vmem:[#allocation2 + $0x90] sm:$0xff]
        %v425 = vld [vmem:[#allocation2 + $0x98] sm:$0xff]
        %v426 = vld [vmem:[#allocation2 + $0xa0] sm:$0xff]
        %v427 = vld [vmem:[#allocation2 + $0xa8] sm:$0xff]
        %v428 = vld [vmem:[#allocation2 + $0xb0] sm:$0xff]
        %v429 = vld [vmem:[#allocation2 + $0xb8] sm:$0xff]
        %v430 = vld [vmem:[#allocation2 + $0xc0] sm:$0xff]
        %v431 = vld [vmem:[#allocation2 + $0xc8] sm:$0xff]
        %v432 = vld [vmem:[#allocation2 + $0xd0] sm:$0xff]
        %v433 = vld [vmem:[#allocation2 + $0xd8] sm:$0xff]
        %v434 = vld [vmem:[#allocation2 + $0xe0] sm:$0xff]
        %v435 = vld [vmem:[#allocation2 + $0xe8] sm:$0xff]
        %v436 = vld [vmem:[#allocation2 + $0xf0] sm:$0xff]
        %v437 = vld [vmem:[#allocation2 + $0xf8] sm:$0xff]
        %v438 = vld [vmem:[#allocation2 + $0x100] sm:$0xff]
        %v439 = vld [vmem:[#allocation2 + $0x108] sm:$0xff]
        %v440 = vld [vmem:[#allocation2 + $0x110] sm:$0xff]
        %v441 = vld [vmem:[#allocation2 + $0x118] sm:$0xff]
        %v442 = vld [vmem:[#allocation2 + $0x120] sm:$0xff]
        %v443 = vld [vmem:[#allocation2 + $0x128] sm:$0xff]
        %v444 = vld [vmem:[#allocation2 + $0x130] sm:$0xff]
        %v445 = vld [vmem:[#allocation2 + $0x138] sm:$0xff]
        %v446 = vld [vmem:[#allocation2 + $0x140] sm:$0xff]
        %v447 = vld [vmem:[#allocation2 + $0x148] sm:$0xff]
        %v448 = vld [vmem:[#allocation2 + $0x150] sm:$0xff]
        %v449 = vld [vmem:[#allocation2 + $0x158] sm:$0xff]
        %v450 = vld [vmem:[#allocation2 + $0x160] sm:$0xff]
        %v451 = vld [vmem:[#allocation2 + $0x168] sm:$0xff]
        %v452 = vld [vmem:[#allocation2 + $0x170] sm:$0xff]
        %v453 = vld [vmem:[#allocation2 + $0x178] sm:$0xff]
        %v454 = vld [vmem:[#allocation2 + $0x180] sm:$0xff]
        %v455 = vld [vmem:[#allocation2 + $0x188] sm:$0xff]
        %v456 = vld [vmem:[#allocation2 + $0x190] sm:$0xff]
        %v457 = vld [vmem:[#allocation2 + $0x198] sm:$0xff]
        %v458 = vld [vmem:[#allocation2 + $0x1a0] sm:$0xff]
        %v459 = vld [vmem:[#allocation2 + $0x1a8] sm:$0xff]
        %v460 = vld [vmem:[#allocation2 + $0x1b0] sm:$0xff]
        %v461 = vld [vmem:[#allocation2 + $0x1b8] sm:$0xff]
        %v462 = vld [vmem:[#allocation2 + $0x1c0] sm:$0xff]
        %v463 = vld [vmem:[#allocation2 + $0x1c8] sm:$0xff]
        %v464 = vld [vmem:[#allocation2 + $0x1d0] sm:$0xff]
        %v465 = vld [vmem:[#allocation2 + $0x1d8] sm:$0xff]
        %v466 = vld [vmem:[#allocation2 + $0x1e0] sm:$0xff]
        %v467 = vld [vmem:[#allocation2 + $0x1e8] sm:$0xff]
        %v468 = vld [vmem:[#allocation2 + $0x1f0] sm:$0xff]
        %v469 = vld [vmem:[#allocation2 + $0x1f8] sm:$0xff]
        %v470 = vld [vmem:[%s304] sm:$0xff]
        %v471 = vld [vmem:[%s304 + $0x8] sm:$0xff]
        %v472 = vld [vmem:[%s304 + $0x10] sm:$0xff]
        %v473 = vld [vmem:[%s304 + $0x18] sm:$0xff]
        %v474 = vld [vmem:[%s304 + $0x20] sm:$0xff]
        %v475 = vld [vmem:[%s304 + $0x28] sm:$0xff]
        %v476 = vld [vmem:[%s304 + $0x30] sm:$0xff]
        %v477 = vld [vmem:[%s304 + $0x38] sm:$0xff]
        %v478 = vld [vmem:[%s304 + $0x40] sm:$0xff]
        %v479 = vld [vmem:[%s304 + $0x48] sm:$0xff]
        %v480 = vld [vmem:[%s304 + $0x50] sm:$0xff]
        %v481 = vld [vmem:[%s304 + $0x58] sm:$0xff]
        %v482 = vld [vmem:[%s304 + $0x60] sm:$0xff]
        %v483 = vld [vmem:[%s304 + $0x68] sm:$0xff]
        %v484 = vld [vmem:[%s304 + $0x70] sm:$0xff]
        %v485 = vld [vmem:[%s304 + $0x78] sm:$0xff]
        %v486 = vld [vmem:[%s304 + $0x80] sm:$0xff]
        %v487 = vld [vmem:[%s304 + $0x88] sm:$0xff]
        %v488 = vld [vmem:[%s304 + $0x90] sm:$0xff]
        %v489 = vld [vmem:[%s304 + $0x98] sm:$0xff]
        %v490 = vld [vmem:[%s304 + $0xa0] sm:$0xff]
        %v491 = vld [vmem:[%s304 + $0xa8] sm:$0xff]
        %v492 = vld [vmem:[%s304 + $0xb0] sm:$0xff]
        %v493 = vld [vmem:[%s304 + $0xb8] sm:$0xff]
        %v494 = vld [vmem:[%s304 + $0xc0] sm:$0xff]
        %v495 = vld [vmem:[%s304 + $0xc8] sm:$0xff]
        %v496 = vld [vmem:[%s304 + $0xd0] sm:$0xff]
        %v497 = vld [vmem:[%s304 + $0xd8] sm:$0xff]
        %v498 = vld [vmem:[%s304 + $0xe0] sm:$0xff]
        %v499 = vld [vmem:[%s304 + $0xe8] sm:$0xff]
        %v500 = vld [vmem:[%s304 + $0xf0] sm:$0xff]
        %v501 = vld [vmem:[%s304 + $0xf8] sm:$0xff]
        %v502 = vld [vmem:[%s304 + $0x100] sm:$0xff]
        %v503 = vld [vmem:[%s304 + $0x108] sm:$0xff]
        %v504 = vld [vmem:[%s304 + $0x110] sm:$0xff]
        %v505 = vld [vmem:[%s304 + $0x118] sm:$0xff]
        %v506 = vld [vmem:[%s304 + $0x120] sm:$0xff]
        %v507 = vld [vmem:[%s304 + $0x128] sm:$0xff]
        %v508 = vld [vmem:[%s304 + $0x130] sm:$0xff]
        %v509 = vld [vmem:[%s304 + $0x138] sm:$0xff]
        %v510 = vld [vmem:[%s304 + $0x140] sm:$0xff]
        %v511 = vld [vmem:[%s304 + $0x148] sm:$0xff]
        %v512 = vld [vmem:[%s304 + $0x150] sm:$0xff]
        %v513 = vld [vmem:[%s304 + $0x158] sm:$0xff]
        %v514 = vld [vmem:[%s304 + $0x160] sm:$0xff]
        %v515 = vld [vmem:[%s304 + $0x168] sm:$0xff]
        %v516 = vld [vmem:[%s304 + $0x170] sm:$0xff]
        %v517 = vld [vmem:[%s304 + $0x178] sm:$0xff]
        %v518 = vld [vmem:[%s304 + $0x180] sm:$0xff]
        %v519 = vld [vmem:[%s304 + $0x188] sm:$0xff]
        %v520 = vld [vmem:[%s304 + $0x190] sm:$0xff]
        %v521 = vld [vmem:[%s304 + $0x198] sm:$0xff]
        %v522 = vld [vmem:[%s304 + $0x1a0] sm:$0xff]
        %v523 = vld [vmem:[%s304 + $0x1a8] sm:$0xff]
        %v524 = vld [vmem:[%s304 + $0x1b0] sm:$0xff]
        %v525 = vld [vmem:[%s304 + $0x1b8] sm:$0xff]
        %v526 = vld [vmem:[%s304 + $0x1c0] sm:$0xff]
        %v527 = vld [vmem:[%s304 + $0x1c8] sm:$0xff]
        %v528 = vld [vmem:[%s304 + $0x1d0] sm:$0xff]
        %v529 = vld [vmem:[%s304 + $0x1d8] sm:$0xff]
        %v530 = vld [vmem:[%s304 + $0x1e0] sm:$0xff]
        %v531 = vld [vmem:[%s304 + $0x1e8] sm:$0xff]
        %v532 = vld [vmem:[%s304 + $0x1f0] sm:$0xff]
        %v533 = vld [vmem:[%s304 + $0x1f8] sm:$0xff]
        %v534 = vld [vmem:[%s314] sm:$0xf]
        %v535 = vld [vmem:[%s314 + $0x4] sm:$0xf]
        %v536 = vld [vmem:[%s314 + $0x8] sm:$0xf]
        %v537 = vld [vmem:[%s314 + $0xc] sm:$0xf]
        %v538 = vld [vmem:[%s314 + $0x10] sm:$0xf]
        %v539 = vld [vmem:[%s314 + $0x14] sm:$0xf]
        %v540 = vld [vmem:[%s314 + $0x18] sm:$0xf]
        %v541 = vld [vmem:[%s314 + $0x1c] sm:$0xf]
        %v542 = vld [vmem:[%s314 + $0x20] sm:$0xf]
        %v543 = vld [vmem:[%s314 + $0x24] sm:$0xf]
        %v544 = vld [vmem:[%s314 + $0x28] sm:$0xf]
        %v545 = vld [vmem:[%s314 + $0x2c] sm:$0xf]
        %v546 = vld [vmem:[%s314 + $0x30] sm:$0xf]
        %v547 = vld [vmem:[%s314 + $0x34] sm:$0xf]
        %v548 = vld [vmem:[%s314 + $0x38] sm:$0xf]
        %v549 = vld [vmem:[%s314 + $0x3c] sm:$0xf]
        %v550 = vld [vmem:[%s314 + $0x40] sm:$0xf]
        %v551 = vld [vmem:[%s314 + $0x44] sm:$0xf]
        %v552 = vld [vmem:[%s314 + $0x48] sm:$0x3]
        %v617 = vunpack.c.l.b16 %v470
        %v618 = vunpack.c.h.b16 %v470
        %v619 = vunpack.c.l.b16 %v471
        %v620 = vunpack.c.h.b16 %v471
        %v621 = vunpack.c.l.b16 %v472
        %v622 = vunpack.c.h.b16 %v472
        %v623 = vunpack.c.l.b16 %v473
        %v624 = vunpack.c.h.b16 %v473
        %v625 = vunpack.c.l.b16 %v474
        %v626 = vunpack.c.h.b16 %v474
        %v627 = vunpack.c.l.b16 %v475
        %v628 = vunpack.c.h.b16 %v475
        %v629 = vunpack.c.l.b16 %v476
        %v630 = vunpack.c.h.b16 %v476
        %v631 = vunpack.c.l.b16 %v477
        %v632 = vunpack.c.h.b16 %v477
        %v633 = vunpack.c.l.b16 %v478
        %v634 = vunpack.c.h.b16 %v478
        %v635 = vunpack.c.l.b16 %v479
        %v636 = vunpack.c.h.b16 %v479
        %v637 = vunpack.c.l.b16 %v480
        %v638 = vunpack.c.h.b16 %v480
        %v639 = vunpack.c.l.b16 %v481
        %v640 = vunpack.c.h.b16 %v481
        %v641 = vunpack.c.l.b16 %v482
        %v642 = vunpack.c.h.b16 %v482
        %v643 = vunpack.c.l.b16 %v483
        %v644 = vunpack.c.h.b16 %v483
        %v645 = vunpack.c.l.b16 %v484
        %v646 = vunpack.c.h.b16 %v484
        %v647 = vunpack.c.l.b16 %v485
        %v648 = vunpack.c.h.b16 %v485
        %v649 = vunpack.c.l.b16 %v486
        %v650 = vunpack.c.h.b16 %v486
        %v651 = vunpack.c.l.b16 %v487
        %v652 = vunpack.c.h.b16 %v487
        %v653 = vunpack.c.l.b16 %v488
        %v654 = vunpack.c.h.b16 %v488
        %v655 = vunpack.c.l.b16 %v489
        %v656 = vunpack.c.h.b16 %v489
        %v657 = vunpack.c.l.b16 %v490
        %v658 = vunpack.c.h.b16 %v490
        %v659 = vunpack.c.l.b16 %v491
        %v660 = vunpack.c.h.b16 %v491
        %v661 = vunpack.c.l.b16 %v492
        %v662 = vunpack.c.h.b16 %v492
        %v663 = vunpack.c.l.b16 %v493
        %v664 = vunpack.c.h.b16 %v493
        %v665 = vunpack.c.l.b16 %v494
        %v666 = vunpack.c.h.b16 %v494
        %v667 = vunpack.c.l.b16 %v495
        %v668 = vunpack.c.h.b16 %v495
        %v669 = vunpack.c.l.b16 %v496
        %v670 = vunpack.c.h.b16 %v496
        %v671 = vunpack.c.l.b16 %v497
        %v672 = vunpack.c.h.b16 %v497
        %v673 = vunpack.c.l.b16 %v498
        %v674 = vunpack.c.h.b16 %v498
        %v675 = vunpack.c.l.b16 %v499
        %v676 = vunpack.c.h.b16 %v499
        %v677 = vunpack.c.l.b16 %v500
        %v678 = vunpack.c.h.b16 %v500
        %v679 = vunpack.c.l.b16 %v501
        %v680 = vunpack.c.h.b16 %v501
        %v681 = vunpack.c.l.b16 %v502
        %v682 = vunpack.c.h.b16 %v502
        %v683 = vunpack.c.l.b16 %v503
        %v684 = vunpack.c.h.b16 %v503
        %v685 = vunpack.c.l.b16 %v504
        %v686 = vunpack.c.h.b16 %v504
        %v687 = vunpack.c.l.b16 %v505
        %v688 = vunpack.c.h.b16 %v505
        %v689 = vunpack.c.l.b16 %v506
        %v690 = vunpack.c.h.b16 %v506
        %v691 = vunpack.c.l.b16 %v507
        %v692 = vunpack.c.h.b16 %v507
        %v693 = vunpack.c.l.b16 %v508
        %v694 = vunpack.c.h.b16 %v508
        %v695 = vunpack.c.l.b16 %v509
        %v696 = vunpack.c.h.b16 %v509
        %v697 = vunpack.c.l.b16 %v510
        %v698 = vunpack.c.h.b16 %v510
        %v699 = vunpack.c.l.b16 %v511
        %v700 = vunpack.c.h.b16 %v511
        %v701 = vunpack.c.l.b16 %v512
        %v702 = vunpack.c.h.b16 %v512
        %v703 = vunpack.c.l.b16 %v513
        %v704 = vunpack.c.h.b16 %v513
        %v705 = vunpack.c.l.b16 %v514
        %v706 = vunpack.c.h.b16 %v514
        %v707 = vunpack.c.l.b16 %v515
        %v708 = vunpack.c.h.b16 %v515
        %v709 = vunpack.c.l.b16 %v516
        %v710 = vunpack.c.h.b16 %v516
        %v711 = vunpack.c.l.b16 %v517
        %v712 = vunpack.c.h.b16 %v517
        %v713 = vunpack.c.l.b16 %v518
        %v714 = vunpack.c.h.b16 %v518
        %v715 = vunpack.c.l.b16 %v519
        %v716 = vunpack.c.h.b16 %v519
        %v717 = vunpack.c.l.b16 %v520
        %v718 = vunpack.c.h.b16 %v520
        %v719 = vunpack.c.l.b16 %v521
        %v720 = vunpack.c.h.b16 %v521
        %v721 = vunpack.c.l.b16 %v522
        %v722 = vunpack.c.h.b16 %v522
        %v723 = vunpack.c.l.b16 %v523
        %v724 = vunpack.c.h.b16 %v523
        %v725 = vunpack.c.l.b16 %v524
        %v726 = vunpack.c.h.b16 %v524
        %v727 = vunpack.c.l.b16 %v525
        %v728 = vunpack.c.h.b16 %v525
        %v729 = vunpack.c.l.b16 %v526
        %v730 = vunpack.c.h.b16 %v526
        %v731 = vunpack.c.l.b16 %v527
        %v732 = vunpack.c.h.b16 %v527
        %v733 = vunpack.c.l.b16 %v528
        %v734 = vunpack.c.h.b16 %v528
        %v735 = vunpack.c.l.b16 %v529
        %v736 = vunpack.c.h.b16 %v529
        %v737 = vunpack.c.l.b16 %v530
        %v738 = vunpack.c.h.b16 %v530
        %v739 = vunpack.c.l.b16 %v531
        %v740 = vunpack.c.h.b16 %v531
        %v741 = vunpack.c.l.b16 %v532
        %v742 = vunpack.c.h.b16 %v532
        %v743 = vunpack.c.l.b16 %v533
        %v744 = vunpack.c.h.b16 %v533
        %v745 = vpack.c.b16 %v619, %v617
        %v746 = vpack.c.b16 %v620, %v618
        %v747 = vpack.c.b16 %v623, %v621
        %v748 = vpack.c.b16 %v624, %v622
        %v749 = vpack.c.b16 %v627, %v625
        %v750 = vpack.c.b16 %v628, %v626
        %v751 = vpack.c.b16 %v631, %v629
        %v752 = vpack.c.b16 %v632, %v630
        %v753 = vpack.c.b16 %v635, %v633
        %v754 = vpack.c.b16 %v636, %v634
        %v755 = vpack.c.b16 %v639, %v637
        %v756 = vpack.c.b16 %v640, %v638
        %v757 = vpack.c.b16 %v643, %v641
        %v758 = vpack.c.b16 %v644, %v642
        %v759 = vpack.c.b16 %v647, %v645
        %v760 = vpack.c.b16 %v648, %v646
        %v761 = vpack.c.b16 %v651, %v649
        %v762 = vpack.c.b16 %v652, %v650
        %v763 = vpack.c.b16 %v655, %v653
        %v764 = vpack.c.b16 %v656, %v654
        %v765 = vpack.c.b16 %v659, %v657
        %v766 = vpack.c.b16 %v660, %v658
        %v767 = vpack.c.b16 %v663, %v661
        %v768 = vpack.c.b16 %v664, %v662
        %v769 = vpack.c.b16 %v667, %v665
        %v770 = vpack.c.b16 %v668, %v666
        %v771 = vpack.c.b16 %v671, %v669
        %v772 = vpack.c.b16 %v672, %v670
        %v773 = vpack.c.b16 %v675, %v673
        %v774 = vpack.c.b16 %v676, %v674
        %v775 = vpack.c.b16 %v679, %v677
        %v776 = vpack.c.b16 %v680, %v678
        %v777 = vpack.c.b16 %v683, %v681
        %v778 = vpack.c.b16 %v684, %v682
        %v779 = vpack.c.b16 %v687, %v685
        %v780 = vpack.c.b16 %v688, %v686
        %v781 = vpack.c.b16 %v691, %v689
        %v782 = vpack.c.b16 %v692, %v690
        %v783 = vpack.c.b16 %v695, %v693
        %v784 = vpack.c.b16 %v696, %v694
        %v785 = vpack.c.b16 %v699, %v697
        %v786 = vpack.c.b16 %v700, %v698
        %v787 = vpack.c.b16 %v703, %v701
        %v788 = vpack.c.b16 %v704, %v702
        %v789 = vpack.c.b16 %v707, %v705
        %v790 = vpack.c.b16 %v708, %v706
        %v791 = vpack.c.b16 %v711, %v709
        %v792 = vpack.c.b16 %v712, %v710
        %v793 = vpack.c.b16 %v715, %v713
        %v794 = vpack.c.b16 %v716, %v714
        %v795 = vpack.c.b16 %v719, %v717
        %v796 = vpack.c.b16 %v720, %v718
        %v797 = vpack.c.b16 %v723, %v721
        %v798 = vpack.c.b16 %v724, %v722
        %v799 = vpack.c.b16 %v727, %v725
        %v800 = vpack.c.b16 %v728, %v726
        %v801 = vpack.c.b16 %v731, %v729
        %v802 = vpack.c.b16 %v732, %v730
        %v803 = vpack.c.b16 %v735, %v733
        %v804 = vpack.c.b16 %v736, %v734
        %v805 = vpack.c.b16 %v739, %v737
        %v806 = vpack.c.b16 %v740, %v738
        %v807 = vpack.c.b16 %v743, %v741
        %v808 = vpack.c.b16 %v744, %v742
        %v860 = vunpack.c.l.b16 %v534
        %v861 = vunpack.c.l.b16 %v535
        %v862 = vunpack.c.l.b16 %v536
        %v863 = vunpack.c.l.b16 %v537
        %v864 = vunpack.c.l.b16 %v538
        %v865 = vunpack.c.l.b16 %v539
        %v866 = vunpack.c.l.b16 %v540
        %v867 = vunpack.c.l.b16 %v541
        %v868 = vunpack.c.l.b16 %v542
        %v869 = vunpack.c.l.b16 %v543
        %v870 = vunpack.c.l.b16 %v544
        %v871 = vunpack.c.l.b16 %v545
        %v872 = vunpack.c.l.b16 %v546
        %v873 = vunpack.c.l.b16 %v547
        %v874 = vunpack.c.l.b16 %v548
        %v875 = vunpack.c.l.b16 %v549
        %v876 = vunpack.c.l.b16 %v550
        %v877 = vunpack.c.l.b16 %v551
        %v878 = vunpack.c.l.b16 %v552
        %v879 = vpack.c.b16 %v861, %v860
        %v880 = vpack.c.b16 %v863, %v862
        %v881 = vpack.c.b16 %v865, %v864
        %v882 = vpack.c.b16 %v867, %v866
        %v883 = vpack.c.b16 %v869, %v868
        %v884 = vpack.c.b16 %v871, %v870
        %v885 = vpack.c.b16 %v873, %v872
        %v886 = vpack.c.b16 %v875, %v874
        %v887 = vpack.c.b16 %v877, %v876
        %v888 = vpack.c.b16 %v878, %v878
        %vm898 = vcmask 154624
        %v900 = vsel %vm898, %v746, 0
        %v903 = vsel %vm898, %v748, 0
        %v906 = vsel %vm898, %v750, 0
        %v909 = vsel %vm898, %v752, 0
        %v912 = vsel %vm898, %v754, 0
        %v915 = vsel %vm898, %v756, 0
        %v918 = vsel %vm898, %v758, 0
        %v921 = vsel %vm898, %v760, 0
        %v924 = vsel %vm898, %v762, 0
        %v927 = vsel %vm898, %v764, 0
        %v930 = vsel %vm898, %v766, 0
        %v933 = vsel %vm898, %v768, 0
        %v936 = vsel %vm898, %v770, 0
        %v939 = vsel %vm898, %v772, 0
        %v942 = vsel %vm898, %v774, 0
        %v945 = vsel %vm898, %v776, 0
        %v948 = vsel %vm898, %v778, 0
        %v951 = vsel %vm898, %v780, 0
        %v954 = vsel %vm898, %v782, 0
        %v957 = vsel %vm898, %v784, 0
        %v960 = vsel %vm898, %v786, 0
        %v963 = vsel %vm898, %v788, 0
        %v966 = vsel %vm898, %v790, 0
        %v969 = vsel %vm898, %v792, 0
        %v972 = vsel %vm898, %v794, 0
        %v975 = vsel %vm898, %v796, 0
        %v978 = vsel %vm898, %v798, 0
        %v981 = vsel %vm898, %v800, 0
        %v984 = vsel %vm898, %v802, 0
        %v987 = vsel %vm898, %v804, 0
        %v990 = vsel %vm898, %v806, 0
        %v993 = vsel %vm898, %v808, 0
        %vm995 = vcmask 1040384
        %vm996 = vcmask 1041408
        %v997 = vsel %vm995, 4294967295, 65535
        %v998 = vsel %vm996, %v997, 0
        %v1000 = vand.u32 %v888, %v998
        %1002 = vmatprep.subr.bf16.mxu0 0
        %1003 = vmatpush1.bf16.msra.mxu0 %v886
        %1004 = vmatprep.subr.bf16.mxu0 0
        %1005 = vmatpush1.bf16.msra.mxu0 %v885
        %1006 = vmatprep.subr.bf16.mxu0 0
        %1007 = vmatpush1.bf16.msra.mxu0 %v884
        %1008 = vmatprep.subr.bf16.mxu0 0
        %1009 = vmatpush1.bf16.msra.mxu0 %v883
        %1010 = vmatprep.subr.bf16.mxu0 0
        %1011 = vmatpush1.bf16.msra.mxu0 %v882
        %1012 = vmatprep.subr.bf16.mxu0 0
        %1013 = vmatpush1.bf16.msra.mxu0 %v881
        %1014 = vmatprep.subr.bf16.mxu0 0
        %1015 = vmatpush1.bf16.msra.mxu0 %v880
        %1016 = vmatprep.subr.bf16.mxu0 0
        %1017 = vmatpush1.bf16.msra.mxu0 %v879
        %1018 = vmatprep.subr.bf16.mxu0 0
        %1019 = vmatpush2.bf16.msra.mxu0 0
        %1020 = vmatprep.subr.bf16.mxu0 0
        %1021 = vmatpush2.bf16.msra.mxu0 0
        %1022 = vmatprep.subr.bf16.mxu0 0
        %1023 = vmatpush2.bf16.msra.mxu0 0
        %1024 = vmatprep.subr.bf16.mxu0 0
        %1025 = vmatpush2.bf16.msra.mxu0 0
        %1026 = vmatprep.subr.bf16.mxu0 0
        %1027 = vmatpush2.bf16.msra.mxu0 0
        %1028 = vmatprep.subr.bf16.mxu0 0
        %1029 = vmatpush2.bf16.msra.mxu0 0
        %1030 = vmatprep.subr.bf16.mxu0 0
        %1031 = vmatpush2.bf16.msra.mxu0 %v1000
        %1032 = vmatprep.subr.bf16.mxu0 0
        %1033 = vmatpush2.bf16.msra.mxu0 %v887
        %1034 = vmatprep.mubr.bf16.mxu0 %v900
        %1035 = vmatmul.mubr.bf16.gmra.mxu0 %v745
        %v1036 = vpop.f32.mrf.mxu0
        %v1037 = vadd.f32 0.0, %v1036
        %v1038 = vpop.f32.mrf.mxu0
        %v1039 = vpop.f32.mrf.mxu0
        %v1040 = vadd.f32 0.0, %v1039
        %v1041 = vpop.f32.mrf.mxu0
        %1042 = vmatprep.mubr.bf16.mxu0 %v903
        %1043 = vmatmul.mubr.bf16.gmra.mxu0 %v747
        %v1044 = vpop.f32.mrf.mxu0
        %v1045 = vadd.f32 0.0, %v1044
        %v1046 = vpop.f32.mrf.mxu0
        %v1047 = vpop.f32.mrf.mxu0
        %v1048 = vadd.f32 0.0, %v1047
        %v1049 = vpop.f32.mrf.mxu0
        %1050 = vmatprep.mubr.bf16.mxu0 %v906
        %1051 = vmatmul.mubr.bf16.gmra.mxu0 %v749
        %v1052 = vpop.f32.mrf.mxu0
        %v1053 = vadd.f32 0.0, %v1052
        %v1054 = vpop.f32.mrf.mxu0
        %v1055 = vpop.f32.mrf.mxu0
        %v1056 = vadd.f32 0.0, %v1055
        %v1057 = vpop.f32.mrf.mxu0
        %1058 = vmatprep.mubr.bf16.mxu0 %v909
        %1059 = vmatmul.mubr.bf16.gmra.mxu0 %v751
        %v1060 = vpop.f32.mrf.mxu0
        %v1061 = vadd.f32 0.0, %v1060
        %v1062 = vpop.f32.mrf.mxu0
        %v1063 = vpop.f32.mrf.mxu0
        %v1064 = vadd.f32 0.0, %v1063
        %v1065 = vpop.f32.mrf.mxu0
        %1066 = vmatprep.mubr.bf16.mxu0 %v912
        %1067 = vmatmul.mubr.bf16.gmra.mxu0 %v753
        %v1068 = vpop.f32.mrf.mxu0
        %v1069 = vadd.f32 0.0, %v1068
        %v1070 = vpop.f32.mrf.mxu0
        %v1071 = vpop.f32.mrf.mxu0
        %v1072 = vadd.f32 0.0, %v1071
        %v1073 = vpop.f32.mrf.mxu0
        %1074 = vmatprep.mubr.bf16.mxu0 %v915
        %1075 = vmatmul.mubr.bf16.gmra.mxu0 %v755
        %v1076 = vpop.f32.mrf.mxu0
        %v1077 = vadd.f32 0.0, %v1076
        %v1078 = vpop.f32.mrf.mxu0
        %v1079 = vpop.f32.mrf.mxu0
        %v1080 = vadd.f32 0.0, %v1079
        %v1081 = vpop.f32.mrf.mxu0
        %1082 = vmatprep.mubr.bf16.mxu0 %v918
        %1083 = vmatmul.mubr.bf16.gmra.mxu0 %v757
        %v1084 = vpop.f32.mrf.mxu0
        %v1085 = vadd.f32 0.0, %v1084
        %v1086 = vpop.f32.mrf.mxu0
        %v1087 = vpop.f32.mrf.mxu0
        %v1088 = vadd.f32 0.0, %v1087
        %v1089 = vpop.f32.mrf.mxu0
        %1090 = vmatprep.mubr.bf16.mxu0 %v921
        %1091 = vmatmul.mubr.bf16.gmra.mxu0 %v759
        %v1092 = vpop.f32.mrf.mxu0
        %v1093 = vadd.f32 0.0, %v1092
        %v1094 = vpop.f32.mrf.mxu0
        %v1095 = vpop.f32.mrf.mxu0
        %v1096 = vadd.f32 0.0, %v1095
        %v1097 = vpop.f32.mrf.mxu0
        %1098 = vmatprep.mubr.bf16.mxu0 %v924
        %1099 = vmatmul.mubr.bf16.gmra.mxu0 %v761
        %v1100 = vpop.f32.mrf.mxu0
        %v1101 = vadd.f32 0.0, %v1100
        %v1102 = vpop.f32.mrf.mxu0
        %v1103 = vpop.f32.mrf.mxu0
        %v1104 = vadd.f32 0.0, %v1103
        %v1105 = vpop.f32.mrf.mxu0
        %1106 = vmatprep.mubr.bf16.mxu0 %v927
        %1107 = vmatmul.mubr.bf16.gmra.mxu0 %v763
        %v1108 = vpop.f32.mrf.mxu0
        %v1109 = vadd.f32 0.0, %v1108
        %v1110 = vpop.f32.mrf.mxu0
        %v1111 = vpop.f32.mrf.mxu0
        %v1112 = vadd.f32 0.0, %v1111
        %v1113 = vpop.f32.mrf.mxu0
        %1114 = vmatprep.mubr.bf16.mxu0 %v930
        %1115 = vmatmul.mubr.bf16.gmra.mxu0 %v765
        %v1116 = vpop.f32.mrf.mxu0
        %v1117 = vadd.f32 0.0, %v1116
        %v1118 = vpop.f32.mrf.mxu0
        %v1119 = vpop.f32.mrf.mxu0
        %v1120 = vadd.f32 0.0, %v1119
        %v1121 = vpop.f32.mrf.mxu0
        %1122 = vmatprep.mubr.bf16.mxu0 %v933
        %1123 = vmatmul.mubr.bf16.gmra.mxu0 %v767
        %v1124 = vpop.f32.mrf.mxu0
        %v1125 = vadd.f32 0.0, %v1124
        %v1126 = vpop.f32.mrf.mxu0
        %v1127 = vpop.f32.mrf.mxu0
        %v1128 = vadd.f32 0.0, %v1127
        %v1129 = vpop.f32.mrf.mxu0
        %1130 = vmatprep.mubr.bf16.mxu0 %v936
        %1131 = vmatmul.mubr.bf16.gmra.mxu0 %v769
        %v1132 = vpop.f32.mrf.mxu0
        %v1133 = vadd.f32 0.0, %v1132
        %v1134 = vpop.f32.mrf.mxu0
        %v1135 = vpop.f32.mrf.mxu0
        %v1136 = vadd.f32 0.0, %v1135
        %v1137 = vpop.f32.mrf.mxu0
        %1138 = vmatprep.mubr.bf16.mxu0 %v939
        %1139 = vmatmul.mubr.bf16.gmra.mxu0 %v771
        %v1140 = vpop.f32.mrf.mxu0
        %v1141 = vadd.f32 0.0, %v1140
        %v1142 = vpop.f32.mrf.mxu0
        %v1143 = vpop.f32.mrf.mxu0
        %v1144 = vadd.f32 0.0, %v1143
        %v1145 = vpop.f32.mrf.mxu0
        %1146 = vmatprep.mubr.bf16.mxu0 %v942
        %1147 = vmatmul.mubr.bf16.gmra.mxu0 %v773
        %v1148 = vpop.f32.mrf.mxu0
        %v1149 = vadd.f32 0.0, %v1148
        %v1150 = vpop.f32.mrf.mxu0
        %v1151 = vpop.f32.mrf.mxu0
        %v1152 = vadd.f32 0.0, %v1151
        %v1153 = vpop.f32.mrf.mxu0
        %1154 = vmatprep.mubr.bf16.mxu0 %v945
        %1155 = vmatmul.mubr.bf16.gmra.mxu0 %v775
        %v1156 = vpop.f32.mrf.mxu0
        %v1157 = vadd.f32 0.0, %v1156
        %v1158 = vpop.f32.mrf.mxu0
        %v1159 = vpop.f32.mrf.mxu0
        %v1160 = vadd.f32 0.0, %v1159
        %v1161 = vpop.f32.mrf.mxu0
        %1162 = vmatprep.mubr.bf16.mxu0 %v948
        %1163 = vmatmul.mubr.bf16.gmra.mxu0 %v777
        %v1164 = vpop.f32.mrf.mxu0
        %v1165 = vadd.f32 0.0, %v1164
        %v1166 = vpop.f32.mrf.mxu0
        %v1167 = vpop.f32.mrf.mxu0
        %v1168 = vadd.f32 0.0, %v1167
        %v1169 = vpop.f32.mrf.mxu0
        %1170 = vmatprep.mubr.bf16.mxu0 %v951
        %1171 = vmatmul.mubr.bf16.gmra.mxu0 %v779
        %v1172 = vpop.f32.mrf.mxu0
        %v1173 = vadd.f32 0.0, %v1172
        %v1174 = vpop.f32.mrf.mxu0
        %v1175 = vpop.f32.mrf.mxu0
        %v1176 = vadd.f32 0.0, %v1175
        %v1177 = vpop.f32.mrf.mxu0
        %1178 = vmatprep.mubr.bf16.mxu0 %v954
        %1179 = vmatmul.mubr.bf16.gmra.mxu0 %v781
        %v1180 = vpop.f32.mrf.mxu0
        %v1181 = vadd.f32 0.0, %v1180
        %v1182 = vpop.f32.mrf.mxu0
        %v1183 = vpop.f32.mrf.mxu0
        %v1184 = vadd.f32 0.0, %v1183
        %v1185 = vpop.f32.mrf.mxu0
        %1186 = vmatprep.mubr.bf16.mxu0 %v957
        %1187 = vmatmul.mubr.bf16.gmra.mxu0 %v783
        %v1188 = vpop.f32.mrf.mxu0
        %v1189 = vadd.f32 0.0, %v1188
        %v1190 = vpop.f32.mrf.mxu0
        %v1191 = vpop.f32.mrf.mxu0
        %v1192 = vadd.f32 0.0, %v1191
        %v1193 = vpop.f32.mrf.mxu0
        %1194 = vmatprep.mubr.bf16.mxu0 %v960
        %1195 = vmatmul.mubr.bf16.gmra.mxu0 %v785
        %v1196 = vpop.f32.mrf.mxu0
        %v1197 = vadd.f32 0.0, %v1196
        %v1198 = vpop.f32.mrf.mxu0
        %v1199 = vpop.f32.mrf.mxu0
        %v1200 = vadd.f32 0.0, %v1199
        %v1201 = vpop.f32.mrf.mxu0
        %1202 = vmatprep.mubr.bf16.mxu0 %v963
        %1203 = vmatmul.mubr.bf16.gmra.mxu0 %v787
        %v1204 = vpop.f32.mrf.mxu0
        %v1205 = vadd.f32 0.0, %v1204
        %v1206 = vpop.f32.mrf.mxu0
        %v1207 = vpop.f32.mrf.mxu0
        %v1208 = vadd.f32 0.0, %v1207
        %v1209 = vpop.f32.mrf.mxu0
        %1210 = vmatprep.mubr.bf16.mxu0 %v966
        %1211 = vmatmul.mubr.bf16.gmra.mxu0 %v789
        %v1212 = vpop.f32.mrf.mxu0
        %v1213 = vadd.f32 0.0, %v1212
        %v1214 = vpop.f32.mrf.mxu0
        %v1215 = vpop.f32.mrf.mxu0
        %v1216 = vadd.f32 0.0, %v1215
        %v1217 = vpop.f32.mrf.mxu0
        %1218 = vmatprep.mubr.bf16.mxu0 %v969
        %1219 = vmatmul.mubr.bf16.gmra.mxu0 %v791
        %v1220 = vpop.f32.mrf.mxu0
        %v1221 = vadd.f32 0.0, %v1220
        %v1222 = vpop.f32.mrf.mxu0
        %v1223 = vpop.f32.mrf.mxu0
        %v1224 = vadd.f32 0.0, %v1223
        %v1225 = vpop.f32.mrf.mxu0
        %1226 = vmatprep.mubr.bf16.mxu0 %v972
        %1227 = vmatmul.mubr.bf16.gmra.mxu0 %v793
        %v1228 = vpop.f32.mrf.mxu0
        %v1229 = vadd.f32 0.0, %v1228
        %v1230 = vpop.f32.mrf.mxu0
        %v1231 = vpop.f32.mrf.mxu0
        %v1232 = vadd.f32 0.0, %v1231
        %v1233 = vpop.f32.mrf.mxu0
        %1234 = vmatprep.mubr.bf16.mxu0 %v975
        %1235 = vmatmul.mubr.bf16.gmra.mxu0 %v795
        %v1236 = vpop.f32.mrf.mxu0
        %v1237 = vadd.f32 0.0, %v1236
        %v1238 = vpop.f32.mrf.mxu0
        %v1239 = vpop.f32.mrf.mxu0
        %v1240 = vadd.f32 0.0, %v1239
        %v1241 = vpop.f32.mrf.mxu0
        %1242 = vmatprep.mubr.bf16.mxu0 %v978
        %1243 = vmatmul.mubr.bf16.gmra.mxu0 %v797
        %v1244 = vpop.f32.mrf.mxu0
        %v1245 = vadd.f32 0.0, %v1244
        %v1246 = vpop.f32.mrf.mxu0
        %v1247 = vpop.f32.mrf.mxu0
        %v1248 = vadd.f32 0.0, %v1247
        %v1249 = vpop.f32.mrf.mxu0
        %1250 = vmatprep.mubr.bf16.mxu0 %v981
        %1251 = vmatmul.mubr.bf16.gmra.mxu0 %v799
        %v1252 = vpop.f32.mrf.mxu0
        %v1253 = vadd.f32 0.0, %v1252
        %v1254 = vpop.f32.mrf.mxu0
        %v1255 = vpop.f32.mrf.mxu0
        %v1256 = vadd.f32 0.0, %v1255
        %v1257 = vpop.f32.mrf.mxu0
        %1258 = vmatprep.mubr.bf16.mxu0 %v984
        %1259 = vmatmul.mubr.bf16.gmra.mxu0 %v801
        %v1260 = vpop.f32.mrf.mxu0
        %v1261 = vadd.f32 0.0, %v1260
        %v1262 = vpop.f32.mrf.mxu0
        %v1263 = vpop.f32.mrf.mxu0
        %v1264 = vadd.f32 0.0, %v1263
        %v1265 = vpop.f32.mrf.mxu0
        %1266 = vmatprep.mubr.bf16.mxu0 %v987
        %1267 = vmatmul.mubr.bf16.gmra.mxu0 %v803
        %v1268 = vpop.f32.mrf.mxu0
        %v1269 = vadd.f32 0.0, %v1268
        %v1270 = vpop.f32.mrf.mxu0
        %v1271 = vpop.f32.mrf.mxu0
        %v1272 = vadd.f32 0.0, %v1271
        %v1273 = vpop.f32.mrf.mxu0
        %1274 = vmatprep.mubr.bf16.mxu0 %v990
        %1275 = vmatmul.mubr.bf16.gmra.mxu0 %v805
        %v1276 = vpop.f32.mrf.mxu0
        %v1277 = vadd.f32 0.0, %v1276
        %v1278 = vpop.f32.mrf.mxu0
        %v1279 = vpop.f32.mrf.mxu0
        %v1280 = vadd.f32 0.0, %v1279
        %v1281 = vpop.f32.mrf.mxu0
        %1282 = vmatprep.mubr.bf16.mxu0 %v993
        %1283 = vmatmul.mubr.bf16.gmra.mxu0 %v807
        %v1284 = vpop.f32.mrf.mxu0
        %v1285 = vadd.f32 0.0, %v1284
        %v1286 = vpop.f32.mrf.mxu0
        %v1287 = vpop.f32.mrf.mxu0
        %v1288 = vadd.f32 0.0, %v1287
        %v1289 = vpop.f32.mrf.mxu0
        %1290 = vdwg.mxu0
        %v1291 = vadd.f32 %v406, %v1037
        %v1292 = vadd.f32 %v407, %v1040
        %v1293 = vadd.f32 %v408, %v1045
        %v1294 = vadd.f32 %v409, %v1048
        %v1295 = vadd.f32 %v410, %v1053
        %v1296 = vadd.f32 %v411, %v1056
        %v1297 = vadd.f32 %v412, %v1061
        %v1298 = vadd.f32 %v413, %v1064
        %v1299 = vadd.f32 %v414, %v1069
        %v1300 = vadd.f32 %v415, %v1072
        %v1301 = vadd.f32 %v416, %v1077
        %v1302 = vadd.f32 %v417, %v1080
        %v1303 = vadd.f32 %v418, %v1085
        %v1304 = vadd.f32 %v419, %v1088
        %v1305 = vadd.f32 %v420, %v1093
        %v1306 = vadd.f32 %v421, %v1096
        %v1307 = vadd.f32 %v422, %v1101
        %v1308 = vadd.f32 %v423, %v1104
        %v1309 = vadd.f32 %v424, %v1109
        %v1310 = vadd.f32 %v425, %v1112
        %v1311 = vadd.f32 %v426, %v1117
        %v1312 = vadd.f32 %v427, %v1120
        %v1313 = vadd.f32 %v428, %v1125
        %v1314 = vadd.f32 %v429, %v1128
        %v1315 = vadd.f32 %v430, %v1133
        %v1316 = vadd.f32 %v431, %v1136
        %v1317 = vadd.f32 %v432, %v1141
        %v1318 = vadd.f32 %v433, %v1144
        %v1319 = vadd.f32 %v434, %v1149
        %v1320 = vadd.f32 %v435, %v1152
        %v1321 = vadd.f32 %v436, %v1157
        %v1322 = vadd.f32 %v437, %v1160
        %v1323 = vadd.f32 %v438, %v1165
        %v1324 = vadd.f32 %v439, %v1168
        %v1325 = vadd.f32 %v440, %v1173
        %v1326 = vadd.f32 %v441, %v1176
        %v1327 = vadd.f32 %v442, %v1181
        %v1328 = vadd.f32 %v443, %v1184
        %v1329 = vadd.f32 %v444, %v1189
        %v1330 = vadd.f32 %v445, %v1192
        %v1331 = vadd.f32 %v446, %v1197
        %v1332 = vadd.f32 %v447, %v1200
        %v1333 = vadd.f32 %v448, %v1205
        %v1334 = vadd.f32 %v449, %v1208
        %v1335 = vadd.f32 %v450, %v1213
        %v1336 = vadd.f32 %v451, %v1216
        %v1337 = vadd.f32 %v452, %v1221
        %v1338 = vadd.f32 %v453, %v1224
        %v1339 = vadd.f32 %v454, %v1229
        %v1340 = vadd.f32 %v455, %v1232
        %v1341 = vadd.f32 %v456, %v1237
        %v1342 = vadd.f32 %v457, %v1240
        %v1343 = vadd.f32 %v458, %v1245
        %v1344 = vadd.f32 %v459, %v1248
        %v1345 = vadd.f32 %v460, %v1253
        %v1346 = vadd.f32 %v461, %v1256
        %v1347 = vadd.f32 %v462, %v1261
        %v1348 = vadd.f32 %v463, %v1264
        %v1349 = vadd.f32 %v464, %v1269
        %v1350 = vadd.f32 %v465, %v1272
        %v1351 = vadd.f32 %v466, %v1277
        %v1352 = vadd.f32 %v467, %v1280
        %v1353 = vadd.f32 %v468, %v1285
        %v1354 = vadd.f32 %v469, %v1288
        %vm1355 = vcmask 523264
        %1356 = vst.msk [vmem:[#allocation2] sm:$0xff] %vm1355, %v1291
        %1357 = vst.msk [vmem:[#allocation2 + $0x8] sm:$0xff] %vm1355, %v1292
        %1358 = vst.msk [vmem:[#allocation2 + $0x10] sm:$0xff] %vm1355, %v1293
        %1359 = vst.msk [vmem:[#allocation2 + $0x18] sm:$0xff] %vm1355, %v1294
        %1360 = vst.msk [vmem:[#allocation2 + $0x20] sm:$0xff] %vm1355, %v1295
        %1361 = vst.msk [vmem:[#allocation2 + $0x28] sm:$0xff] %vm1355, %v1296
        %1362 = vst.msk [vmem:[#allocation2 + $0x30] sm:$0xff] %vm1355, %v1297
        %1363 = vst.msk [vmem:[#allocation2 + $0x38] sm:$0xff] %vm1355, %v1298
        %1364 = vst.msk [vmem:[#allocation2 + $0x40] sm:$0xff] %vm1355, %v1299
        %1365 = vst.msk [vmem:[#allocation2 + $0x48] sm:$0xff] %vm1355, %v1300
        %1366 = vst.msk [vmem:[#allocation2 + $0x50] sm:$0xff] %vm1355, %v1301
        %1367 = vst.msk [vmem:[#allocation2 + $0x58] sm:$0xff] %vm1355, %v1302
        %1368 = vst.msk [vmem:[#allocation2 + $0x60] sm:$0xff] %vm1355, %v1303
        %1369 = vst.msk [vmem:[#allocation2 + $0x68] sm:$0xff] %vm1355, %v1304
        %1370 = vst.msk [vmem:[#allocation2 + $0x70] sm:$0xff] %vm1355, %v1305
        %1371 = vst.msk [vmem:[#allocation2 + $0x78] sm:$0xff] %vm1355, %v1306
        %1372 = vst.msk [vmem:[#allocation2 + $0x80] sm:$0xff] %vm1355, %v1307
        %1373 = vst.msk [vmem:[#allocation2 + $0x88] sm:$0xff] %vm1355, %v1308
        %1374 = vst.msk [vmem:[#allocation2 + $0x90] sm:$0xff] %vm1355, %v1309
        %1375 = vst.msk [vmem:[#allocation2 + $0x98] sm:$0xff] %vm1355, %v1310
        %1376 = vst.msk [vmem:[#allocation2 + $0xa0] sm:$0xff] %vm1355, %v1311
        %1377 = vst.msk [vmem:[#allocation2 + $0xa8] sm:$0xff] %vm1355, %v1312
        %1378 = vst.msk [vmem:[#allocation2 + $0xb0] sm:$0xff] %vm1355, %v1313
        %1379 = vst.msk [vmem:[#allocation2 + $0xb8] sm:$0xff] %vm1355, %v1314
        %1380 = vst.msk [vmem:[#allocation2 + $0xc0] sm:$0xff] %vm1355, %v1315
        %1381 = vst.msk [vmem:[#allocation2 + $0xc8] sm:$0xff] %vm1355, %v1316
        %1382 = vst.msk [vmem:[#allocation2 + $0xd0] sm:$0xff] %vm1355, %v1317
        %1383 = vst.msk [vmem:[#allocation2 + $0xd8] sm:$0xff] %vm1355, %v1318
        %1384 = vst.msk [vmem:[#allocation2 + $0xe0] sm:$0xff] %vm1355, %v1319
        %1385 = vst.msk [vmem:[#allocation2 + $0xe8] sm:$0xff] %vm1355, %v1320
        %1386 = vst.msk [vmem:[#allocation2 + $0xf0] sm:$0xff] %vm1355, %v1321
        %1387 = vst.msk [vmem:[#allocation2 + $0xf8] sm:$0xff] %vm1355, %v1322
        %1388 = vst.msk [vmem:[#allocation2 + $0x100] sm:$0xff] %vm1355, %v1323
        %1389 = vst.msk [vmem:[#allocation2 + $0x108] sm:$0xff] %vm1355, %v1324
        %1390 = vst.msk [vmem:[#allocation2 + $0x110] sm:$0xff] %vm1355, %v1325
        %1391 = vst.msk [vmem:[#allocation2 + $0x118] sm:$0xff] %vm1355, %v1326
        %1392 = vst.msk [vmem:[#allocation2 + $0x120] sm:$0xff] %vm1355, %v1327
        %1393 = vst.msk [vmem:[#allocation2 + $0x128] sm:$0xff] %vm1355, %v1328
        %1394 = vst.msk [vmem:[#allocation2 + $0x130] sm:$0xff] %vm1355, %v1329
        %1395 = vst.msk [vmem:[#allocation2 + $0x138] sm:$0xff] %vm1355, %v1330
        %1396 = vst.msk [vmem:[#allocation2 + $0x140] sm:$0xff] %vm1355, %v1331
        %1397 = vst.msk [vmem:[#allocation2 + $0x148] sm:$0xff] %vm1355, %v1332
        %1398 = vst.msk [vmem:[#allocation2 + $0x150] sm:$0xff] %vm1355, %v1333
        %1399 = vst.msk [vmem:[#allocation2 + $0x158] sm:$0xff] %vm1355, %v1334
        %1400 = vst.msk [vmem:[#allocation2 + $0x160] sm:$0xff] %vm1355, %v1335
        %1401 = vst.msk [vmem:[#allocation2 + $0x168] sm:$0xff] %vm1355, %v1336
        %1402 = vst.msk [vmem:[#allocation2 + $0x170] sm:$0xff] %vm1355, %v1337
        %1403 = vst.msk [vmem:[#allocation2 + $0x178] sm:$0xff] %vm1355, %v1338
        %1404 = vst.msk [vmem:[#allocation2 + $0x180] sm:$0xff] %vm1355, %v1339
        %1405 = vst.msk [vmem:[#allocation2 + $0x188] sm:$0xff] %vm1355, %v1340
        %1406 = vst.msk [vmem:[#allocation2 + $0x190] sm:$0xff] %vm1355, %v1341
        %1407 = vst.msk [vmem:[#allocation2 + $0x198] sm:$0xff] %vm1355, %v1342
        %1408 = vst.msk [vmem:[#allocation2 + $0x1a0] sm:$0xff] %vm1355, %v1343
        %1409 = vst.msk [vmem:[#allocation2 + $0x1a8] sm:$0xff] %vm1355, %v1344
        %1410 = vst.msk [vmem:[#allocation2 + $0x1b0] sm:$0xff] %vm1355, %v1345
        %1411 = vst.msk [vmem:[#allocation2 + $0x1b8] sm:$0xff] %vm1355, %v1346
        %1412 = vst.msk [vmem:[#allocation2 + $0x1c0] sm:$0xff] %vm1355, %v1347
        %1413 = vst.msk [vmem:[#allocation2 + $0x1c8] sm:$0xff] %vm1355, %v1348
        %1414 = vst.msk [vmem:[#allocation2 + $0x1d0] sm:$0xff] %vm1355, %v1349
        %1415 = vst.msk [vmem:[#allocation2 + $0x1d8] sm:$0xff] %vm1355, %v1350
        %1416 = vst.msk [vmem:[#allocation2 + $0x1e0] sm:$0xff] %vm1355, %v1351
        %1417 = vst.msk [vmem:[#allocation2 + $0x1e8] sm:$0xff] %vm1355, %v1352
        %1418 = vst.msk [vmem:[#allocation2 + $0x1f0] sm:$0xff] %vm1355, %v1353
        %1419 = vst.msk [vmem:[#allocation2 + $0x1f8] sm:$0xff] %vm1355, %v1354
        // Predicated region
        $region41: #{_mm_call.1} parent=31 // pred_check
          %p1420 = pneg %p329
        $region42: #{_mm_call.1} parent=31 // pred_check_branch
          %1422 = sbr.rel (%p1420) target = $region44
        $region43: #{_mm_call.1} parent=31 // pred_region
          %v1423 = vld [vmem:[#allocation2] sm:$0xff]
          %v1424 = vld [vmem:[#allocation2 + $0x8] sm:$0xff]
          %v1425 = vld [vmem:[#allocation2 + $0x10] sm:$0xff]
          %v1426 = vld [vmem:[#allocation2 + $0x18] sm:$0xff]
          %v1427 = vld [vmem:[#allocation2 + $0x20] sm:$0xff]
          %v1428 = vld [vmem:[#allocation2 + $0x28] sm:$0xff]
          %v1429 = vld [vmem:[#allocation2 + $0x30] sm:$0xff]
          %v1430 = vld [vmem:[#allocation2 + $0x38] sm:$0xff]
          %v1431 = vld [vmem:[#allocation2 + $0x40] sm:$0xff]
          %v1432 = vld [vmem:[#allocation2 + $0x48] sm:$0xff]
          %v1433 = vld [vmem:[#allocation2 + $0x50] sm:$0xff]
          %v1434 = vld [vmem:[#allocation2 + $0x58] sm:$0xff]
          %v1435 = vld [vmem:[#allocation2 + $0x60] sm:$0xff]
          %v1436 = vld [vmem:[#allocation2 + $0x68] sm:$0xff]
          %v1437 = vld [vmem:[#allocation2 + $0x70] sm:$0xff]
          %v1438 = vld [vmem:[#allocation2 + $0x78] sm:$0xff]
          %v1439 = vld [vmem:[#allocation2 + $0x80] sm:$0xff]
          %v1440 = vld [vmem:[#allocation2 + $0x88] sm:$0xff]
          %v1441 = vld [vmem:[#allocation2 + $0x90] sm:$0xff]
          %v1442 = vld [vmem:[#allocation2 + $0x98] sm:$0xff]
          %v1443 = vld [vmem:[#allocation2 + $0xa0] sm:$0xff]
          %v1444 = vld [vmem:[#allocation2 + $0xa8] sm:$0xff]
          %v1445 = vld [vmem:[#allocation2 + $0xb0] sm:$0xff]
          %v1446 = vld [vmem:[#allocation2 + $0xb8] sm:$0xff]
          %v1447 = vld [vmem:[#allocation2 + $0xc0] sm:$0xff]
          %v1448 = vld [vmem:[#allocation2 + $0xc8] sm:$0xff]
          %v1449 = vld [vmem:[#allocation2 + $0xd0] sm:$0xff]
          %v1450 = vld [vmem:[#allocation2 + $0xd8] sm:$0xff]
          %v1451 = vld [vmem:[#allocation2 + $0xe0] sm:$0xff]
          %v1452 = vld [vmem:[#allocation2 + $0xe8] sm:$0xff]
          %v1453 = vld [vmem:[#allocation2 + $0xf0] sm:$0xff]
          %v1454 = vld [vmem:[#allocation2 + $0xf8] sm:$0xff]
          %v1455 = vld [vmem:[#allocation2 + $0x100] sm:$0xff]
          %v1456 = vld [vmem:[#allocation2 + $0x108] sm:$0xff]
          %v1457 = vld [vmem:[#allocation2 + $0x110] sm:$0xff]
          %v1458 = vld [vmem:[#allocation2 + $0x118] sm:$0xff]
          %v1459 = vld [vmem:[#allocation2 + $0x120] sm:$0xff]
          %v1460 = vld [vmem:[#allocation2 + $0x128] sm:$0xff]
          %v1461 = vld [vmem:[#allocation2 + $0x130] sm:$0xff]
          %v1462 = vld [vmem:[#allocation2 + $0x138] sm:$0xff]
          %v1463 = vld [vmem:[#allocation2 + $0x140] sm:$0xff]
          %v1464 = vld [vmem:[#allocation2 + $0x148] sm:$0xff]
          %v1465 = vld [vmem:[#allocation2 + $0x150] sm:$0xff]
          %v1466 = vld [vmem:[#allocation2 + $0x158] sm:$0xff]
          %v1467 = vld [vmem:[#allocation2 + $0x160] sm:$0xff]
          %v1468 = vld [vmem:[#allocation2 + $0x168] sm:$0xff]
          %v1469 = vld [vmem:[#allocation2 + $0x170] sm:$0xff]
          %v1470 = vld [vmem:[#allocation2 + $0x178] sm:$0xff]
          %v1471 = vld [vmem:[#allocation2 + $0x180] sm:$0xff]
          %v1472 = vld [vmem:[#allocation2 + $0x188] sm:$0xff]
          %v1473 = vld [vmem:[#allocation2 + $0x190] sm:$0xff]
          %v1474 = vld [vmem:[#allocation2 + $0x198] sm:$0xff]
          %v1475 = vld [vmem:[#allocation2 + $0x1a0] sm:$0xff]
          %v1476 = vld [vmem:[#allocation2 + $0x1a8] sm:$0xff]
          %v1477 = vld [vmem:[#allocation2 + $0x1b0] sm:$0xff]
          %v1478 = vld [vmem:[#allocation2 + $0x1b8] sm:$0xff]
          %v1479 = vld [vmem:[#allocation2 + $0x1c0] sm:$0xff]
          %v1480 = vld [vmem:[#allocation2 + $0x1c8] sm:$0xff]
          %v1481 = vld [vmem:[#allocation2 + $0x1d0] sm:$0xff]
          %v1482 = vld [vmem:[#allocation2 + $0x1d8] sm:$0xff]
          %v1483 = vld [vmem:[#allocation2 + $0x1e0] sm:$0xff]
          %v1484 = vld [vmem:[#allocation2 + $0x1e8] sm:$0xff]
          %v1485 = vld [vmem:[#allocation2 + $0x1f0] sm:$0xff]
          %v1486 = vld [vmem:[#allocation2 + $0x1f8] sm:$0xff]
          %v1487 = vld [vmem:[%s318] sm:$0x1]
          %v1489 = vlaneseq
          %v1490 = vshrl.u32 %v1489, 7
          %v1491 = vsub.s32 0, %v1490
          %v1492 = vrot.slane %v1487, %v1491
          %v1494 = vadd.f32 %v1423, %v1492
          %v1495 = vadd.f32 %v1424, %v1492
          %v1496 = vadd.f32 %v1425, %v1492
          %v1497 = vadd.f32 %v1426, %v1492
          %v1498 = vadd.f32 %v1427, %v1492
          %v1499 = vadd.f32 %v1428, %v1492
          %v1500 = vadd.f32 %v1429, %v1492
          %v1501 = vadd.f32 %v1430, %v1492
          %v1502 = vadd.f32 %v1431, %v1492
          %v1503 = vadd.f32 %v1432, %v1492
          %v1504 = vadd.f32 %v1433, %v1492
          %v1505 = vadd.f32 %v1434, %v1492
          %v1506 = vadd.f32 %v1435, %v1492
          %v1507 = vadd.f32 %v1436, %v1492
          %v1508 = vadd.f32 %v1437, %v1492
          %v1509 = vadd.f32 %v1438, %v1492
          %v1510 = vadd.f32 %v1439, %v1492
          %v1511 = vadd.f32 %v1440, %v1492
          %v1512 = vadd.f32 %v1441, %v1492
          %v1513 = vadd.f32 %v1442, %v1492
          %v1514 = vadd.f32 %v1443, %v1492
          %v1515 = vadd.f32 %v1444, %v1492
          %v1516 = vadd.f32 %v1445, %v1492
          %v1517 = vadd.f32 %v1446, %v1492
          %v1518 = vadd.f32 %v1447, %v1492
          %v1519 = vadd.f32 %v1448, %v1492
          %v1520 = vadd.f32 %v1449, %v1492
          %v1521 = vadd.f32 %v1450, %v1492
          %v1522 = vadd.f32 %v1451, %v1492
          %v1523 = vadd.f32 %v1452, %v1492
          %v1524 = vadd.f32 %v1453, %v1492
          %v1525 = vadd.f32 %v1454, %v1492
          %v1526 = vadd.f32 %v1455, %v1492
          %v1527 = vadd.f32 %v1456, %v1492
          %v1528 = vadd.f32 %v1457, %v1492
          %v1529 = vadd.f32 %v1458, %v1492
          %v1530 = vadd.f32 %v1459, %v1492
          %v1531 = vadd.f32 %v1460, %v1492
          %v1532 = vadd.f32 %v1461, %v1492
          %v1533 = vadd.f32 %v1462, %v1492
          %v1534 = vadd.f32 %v1463, %v1492
          %v1535 = vadd.f32 %v1464, %v1492
          %v1536 = vadd.f32 %v1465, %v1492
          %v1537 = vadd.f32 %v1466, %v1492
          %v1538 = vadd.f32 %v1467, %v1492
          %v1539 = vadd.f32 %v1468, %v1492
          %v1540 = vadd.f32 %v1469, %v1492
          %v1541 = vadd.f32 %v1470, %v1492
          %v1542 = vadd.f32 %v1471, %v1492
          %v1543 = vadd.f32 %v1472, %v1492
          %v1544 = vadd.f32 %v1473, %v1492
          %v1545 = vadd.f32 %v1474, %v1492
          %v1546 = vadd.f32 %v1475, %v1492
          %v1547 = vadd.f32 %v1476, %v1492
          %v1548 = vadd.f32 %v1477, %v1492
          %v1549 = vadd.f32 %v1478, %v1492
          %v1550 = vadd.f32 %v1479, %v1492
          %v1551 = vadd.f32 %v1480, %v1492
          %v1552 = vadd.f32 %v1481, %v1492
          %v1553 = vadd.f32 %v1482, %v1492
          %v1554 = vadd.f32 %v1483, %v1492
          %v1555 = vadd.f32 %v1484, %v1492
          %v1556 = vadd.f32 %v1485, %v1492
          %v1557 = vadd.f32 %v1486, %v1492
          %1558 = vst.msk [vmem:[%s326] sm:$0xff] %vm1355, %v1494
          %1559 = vst.msk [vmem:[%s326 + $0x8] sm:$0xff] %vm1355, %v1495
          %1560 = vst.msk [vmem:[%s326 + $0x10] sm:$0xff] %vm1355, %v1496
          %1561 = vst.msk [vmem:[%s326 + $0x18] sm:$0xff] %vm1355, %v1497
          %1562 = vst.msk [vmem:[%s326 + $0x20] sm:$0xff] %vm1355, %v1498
          %1563 = vst.msk [vmem:[%s326 + $0x28] sm:$0xff] %vm1355, %v1499
          %1564 = vst.msk [vmem:[%s326 + $0x30] sm:$0xff] %vm1355, %v1500
          %1565 = vst.msk [vmem:[%s326 + $0x38] sm:$0xff] %vm1355, %v1501
          %1566 = vst.msk [vmem:[%s326 + $0x40] sm:$0xff] %vm1355, %v1502
          %1567 = vst.msk [vmem:[%s326 + $0x48] sm:$0xff] %vm1355, %v1503
          %1568 = vst.msk [vmem:[%s326 + $0x50] sm:$0xff] %vm1355, %v1504
          %1569 = vst.msk [vmem:[%s326 + $0x58] sm:$0xff] %vm1355, %v1505
          %1570 = vst.msk [vmem:[%s326 + $0x60] sm:$0xff] %vm1355, %v1506
          %1571 = vst.msk [vmem:[%s326 + $0x68] sm:$0xff] %vm1355, %v1507
          %1572 = vst.msk [vmem:[%s326 + $0x70] sm:$0xff] %vm1355, %v1508
          %1573 = vst.msk [vmem:[%s326 + $0x78] sm:$0xff] %vm1355, %v1509
          %1574 = vst.msk [vmem:[%s326 + $0x80] sm:$0xff] %vm1355, %v1510
          %1575 = vst.msk [vmem:[%s326 + $0x88] sm:$0xff] %vm1355, %v1511
          %1576 = vst.msk [vmem:[%s326 + $0x90] sm:$0xff] %vm1355, %v1512
          %1577 = vst.msk [vmem:[%s326 + $0x98] sm:$0xff] %vm1355, %v1513
          %1578 = vst.msk [vmem:[%s326 + $0xa0] sm:$0xff] %vm1355, %v1514
          %1579 = vst.msk [vmem:[%s326 + $0xa8] sm:$0xff] %vm1355, %v1515
          %1580 = vst.msk [vmem:[%s326 + $0xb0] sm:$0xff] %vm1355, %v1516
          %1581 = vst.msk [vmem:[%s326 + $0xb8] sm:$0xff] %vm1355, %v1517
          %1582 = vst.msk [vmem:[%s326 + $0xc0] sm:$0xff] %vm1355, %v1518
          %1583 = vst.msk [vmem:[%s326 + $0xc8] sm:$0xff] %vm1355, %v1519
          %1584 = vst.msk [vmem:[%s326 + $0xd0] sm:$0xff] %vm1355, %v1520
          %1585 = vst.msk [vmem:[%s326 + $0xd8] sm:$0xff] %vm1355, %v1521
          %1586 = vst.msk [vmem:[%s326 + $0xe0] sm:$0xff] %vm1355, %v1522
          %1587 = vst.msk [vmem:[%s326 + $0xe8] sm:$0xff] %vm1355, %v1523
          %1588 = vst.msk [vmem:[%s326 + $0xf0] sm:$0xff] %vm1355, %v1524
          %1589 = vst.msk [vmem:[%s326 + $0xf8] sm:$0xff] %vm1355, %v1525
          %1590 = vst.msk [vmem:[%s326 + $0x100] sm:$0xff] %vm1355, %v1526
          %1591 = vst.msk [vmem:[%s326 + $0x108] sm:$0xff] %vm1355, %v1527
          %1592 = vst.msk [vmem:[%s326 + $0x110] sm:$0xff] %vm1355, %v1528
          %1593 = vst.msk [vmem:[%s326 + $0x118] sm:$0xff] %vm1355, %v1529
          %1594 = vst.msk [vmem:[%s326 + $0x120] sm:$0xff] %vm1355, %v1530
          %1595 = vst.msk [vmem:[%s326 + $0x128] sm:$0xff] %vm1355, %v1531
          %1596 = vst.msk [vmem:[%s326 + $0x130] sm:$0xff] %vm1355, %v1532
          %1597 = vst.msk [vmem:[%s326 + $0x138] sm:$0xff] %vm1355, %v1533
          %1598 = vst.msk [vmem:[%s326 + $0x140] sm:$0xff] %vm1355, %v1534
          %1599 = vst.msk [vmem:[%s326 + $0x148] sm:$0xff] %vm1355, %v1535
          %1600 = vst.msk [vmem:[%s326 + $0x150] sm:$0xff] %vm1355, %v1536
          %1601 = vst.msk [vmem:[%s326 + $0x158] sm:$0xff] %vm1355, %v1537
          %1602 = vst.msk [vmem:[%s326 + $0x160] sm:$0xff] %vm1355, %v1538
          %1603 = vst.msk [vmem:[%s326 + $0x168] sm:$0xff] %vm1355, %v1539
          %1604 = vst.msk [vmem:[%s326 + $0x170] sm:$0xff] %vm1355, %v1540
          %1605 = vst.msk [vmem:[%s326 + $0x178] sm:$0xff] %vm1355, %v1541
          %1606 = vst.msk [vmem:[%s326 + $0x180] sm:$0xff] %vm1355, %v1542
          %1607 = vst.msk [vmem:[%s326 + $0x188] sm:$0xff] %vm1355, %v1543
          %1608 = vst.msk [vmem:[%s326 + $0x190] sm:$0xff] %vm1355, %v1544
          %1609 = vst.msk [vmem:[%s326 + $0x198] sm:$0xff] %vm1355, %v1545
          %1610 = vst.msk [vmem:[%s326 + $0x1a0] sm:$0xff] %vm1355, %v1546
          %1611 = vst.msk [vmem:[%s326 + $0x1a8] sm:$0xff] %vm1355, %v1547
          %1612 = vst.msk [vmem:[%s326 + $0x1b0] sm:$0xff] %vm1355, %v1548
          %1613 = vst.msk [vmem:[%s326 + $0x1b8] sm:$0xff] %vm1355, %v1549
          %1614 = vst.msk [vmem:[%s326 + $0x1c0] sm:$0xff] %vm1355, %v1550
          %1615 = vst.msk [vmem:[%s326 + $0x1c8] sm:$0xff] %vm1355, %v1551
          %1616 = vst.msk [vmem:[%s326 + $0x1d0] sm:$0xff] %vm1355, %v1552
          %1617 = vst.msk [vmem:[%s326 + $0x1d8] sm:$0xff] %vm1355, %v1553
          %1618 = vst.msk [vmem:[%s326 + $0x1e0] sm:$0xff] %vm1355, %v1554
          %1619 = vst.msk [vmem:[%s326 + $0x1e8] sm:$0xff] %vm1355, %v1555
          %1620 = vst.msk [vmem:[%s326 + $0x1f0] sm:$0xff] %vm1355, %v1556
          %1621 = vst.msk [vmem:[%s326 + $0x1f8] sm:$0xff] %vm1355, %v1557
          %v1622 = vld [vmem:[#allocation3] sm:$0x1]
          %v1623 = vsel %vm1355, %v1494, 0.0
          %v1624 = vsel %vm1355, %v1495, 0.0
          %v1625 = vadd.f32 %v1623, %v1624
          %v1626 = vsel %vm1355, %v1496, 0.0
          %v1627 = vadd.f32 %v1625, %v1626
          %v1628 = vsel %vm1355, %v1497, 0.0
          %v1629 = vadd.f32 %v1627, %v1628
          %v1630 = vsel %vm1355, %v1498, 0.0
          %v1631 = vadd.f32 %v1629, %v1630
          %v1632 = vsel %vm1355, %v1499, 0.0
          %v1633 = vadd.f32 %v1631, %v1632
          %v1634 = vsel %vm1355, %v1500, 0.0
          %v1635 = vadd.f32 %v1633, %v1634
          %v1636 = vsel %vm1355, %v1501, 0.0
          %v1637 = vadd.f32 %v1635, %v1636
          %v1638 = vsel %vm1355, %v1502, 0.0
          %v1639 = vadd.f32 %v1637, %v1638
          %v1640 = vsel %vm1355, %v1503, 0.0
          %v1641 = vadd.f32 %v1639, %v1640
          %v1642 = vsel %vm1355, %v1504, 0.0
          %v1643 = vadd.f32 %v1641, %v1642
          %v1644 = vsel %vm1355, %v1505, 0.0
          %v1645 = vadd.f32 %v1643, %v1644
          %v1646 = vsel %vm1355, %v1506, 0.0
          %v1647 = vadd.f32 %v1645, %v1646
          %v1648 = vsel %vm1355, %v1507, 0.0
          %v1649 = vadd.f32 %v1647, %v1648
          %v1650 = vsel %vm1355, %v1508, 0.0
          %v1651 = vadd.f32 %v1649, %v1650
          %v1652 = vsel %vm1355, %v1509, 0.0
          %v1653 = vadd.f32 %v1651, %v1652
          %v1654 = vsel %vm1355, %v1510, 0.0
          %v1655 = vadd.f32 %v1653, %v1654
          %v1656 = vsel %vm1355, %v1511, 0.0
          %v1657 = vadd.f32 %v1655, %v1656
          %v1658 = vsel %vm1355, %v1512, 0.0
          %v1659 = vadd.f32 %v1657, %v1658
          %v1660 = vsel %vm1355, %v1513, 0.0
          %v1661 = vadd.f32 %v1659, %v1660
          %v1662 = vsel %vm1355, %v1514, 0.0
          %v1663 = vadd.f32 %v1661, %v1662
          %v1664 = vsel %vm1355, %v1515, 0.0
          %v1665 = vadd.f32 %v1663, %v1664
          %v1666 = vsel %vm1355, %v1516, 0.0
          %v1667 = vadd.f32 %v1665, %v1666
          %v1668 = vsel %vm1355, %v1517, 0.0
          %v1669 = vadd.f32 %v1667, %v1668
          %v1670 = vsel %vm1355, %v1518, 0.0
          %v1671 = vadd.f32 %v1669, %v1670
          %v1672 = vsel %vm1355, %v1519, 0.0
          %v1673 = vadd.f32 %v1671, %v1672
          %v1674 = vsel %vm1355, %v1520, 0.0
          %v1675 = vadd.f32 %v1673, %v1674
          %v1676 = vsel %vm1355, %v1521, 0.0
          %v1677 = vadd.f32 %v1675, %v1676
          %v1678 = vsel %vm1355, %v1522, 0.0
          %v1679 = vadd.f32 %v1677, %v1678
          %v1680 = vsel %vm1355, %v1523, 0.0
          %v1681 = vadd.f32 %v1679, %v1680
          %v1682 = vsel %vm1355, %v1524, 0.0
          %v1683 = vadd.f32 %v1681, %v1682
          %v1684 = vsel %vm1355, %v1525, 0.0
          %v1685 = vadd.f32 %v1683, %v1684
          %v1686 = vsel %vm1355, %v1526, 0.0
          %v1687 = vadd.f32 %v1685, %v1686
          %v1688 = vsel %vm1355, %v1527, 0.0
          %v1689 = vadd.f32 %v1687, %v1688
          %v1690 = vsel %vm1355, %v1528, 0.0
          %v1691 = vadd.f32 %v1689, %v1690
          %v1692 = vsel %vm1355, %v1529, 0.0
          %v1693 = vadd.f32 %v1691, %v1692
          %v1694 = vsel %vm1355, %v1530, 0.0
          %v1695 = vadd.f32 %v1693, %v1694
          %v1696 = vsel %vm1355, %v1531, 0.0
          %v1697 = vadd.f32 %v1695, %v1696
          %v1698 = vsel %vm1355, %v1532, 0.0
          %v1699 = vadd.f32 %v1697, %v1698
          %v1700 = vsel %vm1355, %v1533, 0.0
          %v1701 = vadd.f32 %v1699, %v1700
          %v1702 = vsel %vm1355, %v1534, 0.0
          %v1703 = vadd.f32 %v1701, %v1702
          %v1704 = vsel %vm1355, %v1535, 0.0
          %v1705 = vadd.f32 %v1703, %v1704
          %v1706 = vsel %vm1355, %v1536, 0.0
          %v1707 = vadd.f32 %v1705, %v1706
          %v1708 = vsel %vm1355, %v1537, 0.0
          %v1709 = vadd.f32 %v1707, %v1708
          %v1710 = vsel %vm1355, %v1538, 0.0
          %v1711 = vadd.f32 %v1709, %v1710
          %v1712 = vsel %vm1355, %v1539, 0.0
          %v1713 = vadd.f32 %v1711, %v1712
          %v1714 = vsel %vm1355, %v1540, 0.0
          %v1715 = vadd.f32 %v1713, %v1714
          %v1716 = vsel %vm1355, %v1541, 0.0
          %v1717 = vadd.f32 %v1715, %v1716
          %v1718 = vsel %vm1355, %v1542, 0.0
          %v1719 = vadd.f32 %v1717, %v1718
          %v1720 = vsel %vm1355, %v1543, 0.0
          %v1721 = vadd.f32 %v1719, %v1720
          %v1722 = vsel %vm1355, %v1544, 0.0
          %v1723 = vadd.f32 %v1721, %v1722
          %v1724 = vsel %vm1355, %v1545, 0.0
          %v1725 = vadd.f32 %v1723, %v1724
          %v1726 = vsel %vm1355, %v1546, 0.0
          %v1727 = vadd.f32 %v1725, %v1726
          %v1728 = vsel %vm1355, %v1547, 0.0
          %v1729 = vadd.f32 %v1727, %v1728
          %v1730 = vsel %vm1355, %v1548, 0.0
          %v1731 = vadd.f32 %v1729, %v1730
          %v1732 = vsel %vm1355, %v1549, 0.0
          %v1733 = vadd.f32 %v1731, %v1732
          %v1734 = vsel %vm1355, %v1550, 0.0
          %v1735 = vadd.f32 %v1733, %v1734
          %v1736 = vsel %vm1355, %v1551, 0.0
          %v1737 = vadd.f32 %v1735, %v1736
          %v1738 = vsel %vm1355, %v1552, 0.0
          %v1739 = vadd.f32 %v1737, %v1738
          %v1740 = vsel %vm1355, %v1553, 0.0
          %v1741 = vadd.f32 %v1739, %v1740
          %v1742 = vsel %vm1355, %v1554, 0.0
          %v1743 = vadd.f32 %v1741, %v1742
          %v1744 = vsel %vm1355, %v1555, 0.0
          %v1745 = vadd.f32 %v1743, %v1744
          %v1746 = vsel %vm1355, %v1556, 0.0
          %v1747 = vadd.f32 %v1745, %v1746
          %v1748 = vsel %vm1355, %v1557, 0.0
          %v1749 = vadd.f32 %v1747, %v1748
          %v1750 = vrot.slane %v1749, 4
          %v1751 = vadd.f32 %v1749, %v1750
          %v1752 = vrot.slane %v1751, 2
          %v1753 = vadd.f32 %v1751, %v1752
          %v1754 = vrot.slane %v1753, 1
          %v1755 = vadd.f32 %v1753, %v1754
          %v1756 = vadd.f32 %v1622, %v1755
          %vm1757 = vcmask 516096
          %1758 = vst.msk [vmem:[#allocation3] sm:$0x1] %vm1757, %v1756
          %v1759 = vld [vmem:[#allocation5] sm:$0x1]
          %v1760 = vmul.f32 %v1494, %v1494
          %v1761 = vmul.f32 %v1495, %v1495
          %v1762 = vmul.f32 %v1496, %v1496
          %v1763 = vmul.f32 %v1497, %v1497
          %v1764 = vmul.f32 %v1498, %v1498
          %v1765 = vmul.f32 %v1499, %v1499
          %v1766 = vmul.f32 %v1500, %v1500
          %v1767 = vmul.f32 %v1501, %v1501
          %v1768 = vmul.f32 %v1502, %v1502
          %v1769 = vmul.f32 %v1503, %v1503
          %v1770 = vmul.f32 %v1504, %v1504
          %v1771 = vmul.f32 %v1505, %v1505
          %v1772 = vmul.f32 %v1506, %v1506
          %v1773 = vmul.f32 %v1507, %v1507
          %v1774 = vmul.f32 %v1508, %v1508
          %v1775 = vmul.f32 %v1509, %v1509
          %v1776 = vmul.f32 %v1510, %v1510
          %v1777 = vmul.f32 %v1511, %v1511
          %v1778 = vmul.f32 %v1512, %v1512
          %v1779 = vmul.f32 %v1513, %v1513
          %v1780 = vmul.f32 %v1514, %v1514
          %v1781 = vmul.f32 %v1515, %v1515
          %v1782 = vmul.f32 %v1516, %v1516
          %v1783 = vmul.f32 %v1517, %v1517
          %v1784 = vmul.f32 %v1518, %v1518
          %v1785 = vmul.f32 %v1519, %v1519
          %v1786 = vmul.f32 %v1520, %v1520
          %v1787 = vmul.f32 %v1521, %v1521
          %v1788 = vmul.f32 %v1522, %v1522
          %v1789 = vmul.f32 %v1523, %v1523
          %v1790 = vmul.f32 %v1524, %v1524
          %v1791 = vmul.f32 %v1525, %v1525
          %v1792 = vmul.f32 %v1526, %v1526
          %v1793 = vmul.f32 %v1527, %v1527
          %v1794 = vmul.f32 %v1528, %v1528
          %v1795 = vmul.f32 %v1529, %v1529
          %v1796 = vmul.f32 %v1530, %v1530
          %v1797 = vmul.f32 %v1531, %v1531
          %v1798 = vmul.f32 %v1532, %v1532
          %v1799 = vmul.f32 %v1533, %v1533
          %v1800 = vmul.f32 %v1534, %v1534
          %v1801 = vmul.f32 %v1535, %v1535
          %v1802 = vmul.f32 %v1536, %v1536
          %v1803 = vmul.f32 %v1537, %v1537
          %v1804 = vmul.f32 %v1538, %v1538
          %v1805 = vmul.f32 %v1539, %v1539
          %v1806 = vmul.f32 %v1540, %v1540
          %v1807 = vmul.f32 %v1541, %v1541
          %v1808 = vmul.f32 %v1542, %v1542
          %v1809 = vmul.f32 %v1543, %v1543
          %v1810 = vmul.f32 %v1544, %v1544
          %v1811 = vmul.f32 %v1545, %v1545
          %v1812 = vmul.f32 %v1546, %v1546
          %v1813 = vmul.f32 %v1547, %v1547
          %v1814 = vmul.f32 %v1548, %v1548
          %v1815 = vmul.f32 %v1549, %v1549
          %v1816 = vmul.f32 %v1550, %v1550
          %v1817 = vmul.f32 %v1551, %v1551
          %v1818 = vmul.f32 %v1552, %v1552
          %v1819 = vmul.f32 %v1553, %v1553
          %v1820 = vmul.f32 %v1554, %v1554
          %v1821 = vmul.f32 %v1555, %v1555
          %v1822 = vmul.f32 %v1556, %v1556
          %v1823 = vmul.f32 %v1557, %v1557
          %v1824 = vsel %vm1355, %v1760, 0.0
          %v1825 = vsel %vm1355, %v1761, 0.0
          %v1826 = vadd.f32 %v1824, %v1825
          %v1827 = vsel %vm1355, %v1762, 0.0
          %v1828 = vadd.f32 %v1826, %v1827
          %v1829 = vsel %vm1355, %v1763, 0.0
          %v1830 = vadd.f32 %v1828, %v1829
          %v1831 = vsel %vm1355, %v1764, 0.0
          %v1832 = vadd.f32 %v1830, %v1831
          %v1833 = vsel %vm1355, %v1765, 0.0
          %v1834 = vadd.f32 %v1832, %v1833
          %v1835 = vsel %vm1355, %v1766, 0.0
          %v1836 = vadd.f32 %v1834, %v1835
          %v1837 = vsel %vm1355, %v1767, 0.0
          %v1838 = vadd.f32 %v1836, %v1837
          %v1839 = vsel %vm1355, %v1768, 0.0
          %v1840 = vadd.f32 %v1838, %v1839
          %v1841 = vsel %vm1355, %v1769, 0.0
          %v1842 = vadd.f32 %v1840, %v1841
          %v1843 = vsel %vm1355, %v1770, 0.0
          %v1844 = vadd.f32 %v1842, %v1843
          %v1845 = vsel %vm1355, %v1771, 0.0
          %v1846 = vadd.f32 %v1844, %v1845
          %v1847 = vsel %vm1355, %v1772, 0.0
          %v1848 = vadd.f32 %v1846, %v1847
          %v1849 = vsel %vm1355, %v1773, 0.0
          %v1850 = vadd.f32 %v1848, %v1849
          %v1851 = vsel %vm1355, %v1774, 0.0
          %v1852 = vadd.f32 %v1850, %v1851
          %v1853 = vsel %vm1355, %v1775, 0.0
          %v1854 = vadd.f32 %v1852, %v1853
          %v1855 = vsel %vm1355, %v1776, 0.0
          %v1856 = vadd.f32 %v1854, %v1855
          %v1857 = vsel %vm1355, %v1777, 0.0
          %v1858 = vadd.f32 %v1856, %v1857
          %v1859 = vsel %vm1355, %v1778, 0.0
          %v1860 = vadd.f32 %v1858, %v1859
          %v1861 = vsel %vm1355, %v1779, 0.0
          %v1862 = vadd.f32 %v1860, %v1861
          %v1863 = vsel %vm1355, %v1780, 0.0
          %v1864 = vadd.f32 %v1862, %v1863
          %v1865 = vsel %vm1355, %v1781, 0.0
          %v1866 = vadd.f32 %v1864, %v1865
          %v1867 = vsel %vm1355, %v1782, 0.0
          %v1868 = vadd.f32 %v1866, %v1867
          %v1869 = vsel %vm1355, %v1783, 0.0
          %v1870 = vadd.f32 %v1868, %v1869
          %v1871 = vsel %vm1355, %v1784, 0.0
          %v1872 = vadd.f32 %v1870, %v1871
          %v1873 = vsel %vm1355, %v1785, 0.0
          %v1874 = vadd.f32 %v1872, %v1873
          %v1875 = vsel %vm1355, %v1786, 0.0
          %v1876 = vadd.f32 %v1874, %v1875
          %v1877 = vsel %vm1355, %v1787, 0.0
          %v1878 = vadd.f32 %v1876, %v1877
          %v1879 = vsel %vm1355, %v1788, 0.0
          %v1880 = vadd.f32 %v1878, %v1879
          %v1881 = vsel %vm1355, %v1789, 0.0
          %v1882 = vadd.f32 %v1880, %v1881
          %v1883 = vsel %vm1355, %v1790, 0.0
          %v1884 = vadd.f32 %v1882, %v1883
          %v1885 = vsel %vm1355, %v1791, 0.0
          %v1886 = vadd.f32 %v1884, %v1885
          %v1887 = vsel %vm1355, %v1792, 0.0
          %v1888 = vadd.f32 %v1886, %v1887
          %v1889 = vsel %vm1355, %v1793, 0.0
          %v1890 = vadd.f32 %v1888, %v1889
          %v1891 = vsel %vm1355, %v1794, 0.0
          %v1892 = vadd.f32 %v1890, %v1891
          %v1893 = vsel %vm1355, %v1795, 0.0
          %v1894 = vadd.f32 %v1892, %v1893
          %v1895 = vsel %vm1355, %v1796, 0.0
          %v1896 = vadd.f32 %v1894, %v1895
          %v1897 = vsel %vm1355, %v1797, 0.0
          %v1898 = vadd.f32 %v1896, %v1897
          %v1899 = vsel %vm1355, %v1798, 0.0
          %v1900 = vadd.f32 %v1898, %v1899
          %v1901 = vsel %vm1355, %v1799, 0.0
          %v1902 = vadd.f32 %v1900, %v1901
          %v1903 = vsel %vm1355, %v1800, 0.0
          %v1904 = vadd.f32 %v1902, %v1903
          %v1905 = vsel %vm1355, %v1801, 0.0
          %v1906 = vadd.f32 %v1904, %v1905
          %v1907 = vsel %vm1355, %v1802, 0.0
          %v1908 = vadd.f32 %v1906, %v1907
          %v1909 = vsel %vm1355, %v1803, 0.0
          %v1910 = vadd.f32 %v1908, %v1909
          %v1911 = vsel %vm1355, %v1804, 0.0
          %v1912 = vadd.f32 %v1910, %v1911
          %v1913 = vsel %vm1355, %v1805, 0.0
          %v1914 = vadd.f32 %v1912, %v1913
          %v1915 = vsel %vm1355, %v1806, 0.0
          %v1916 = vadd.f32 %v1914, %v1915
          %v1917 = vsel %vm1355, %v1807, 0.0
          %v1918 = vadd.f32 %v1916, %v1917
          %v1919 = vsel %vm1355, %v1808, 0.0
          %v1920 = vadd.f32 %v1918, %v1919
          %v1921 = vsel %vm1355, %v1809, 0.0
          %v1922 = vadd.f32 %v1920, %v1921
          %v1923 = vsel %vm1355, %v1810, 0.0
          %v1924 = vadd.f32 %v1922, %v1923
          %v1925 = vsel %vm1355, %v1811, 0.0
          %v1926 = vadd.f32 %v1924, %v1925
          %v1927 = vsel %vm1355, %v1812, 0.0
          %v1928 = vadd.f32 %v1926, %v1927
          %v1929 = vsel %vm1355, %v1813, 0.0
          %v1930 = vadd.f32 %v1928, %v1929
          %v1931 = vsel %vm1355, %v1814, 0.0
          %v1932 = vadd.f32 %v1930, %v1931
          %v1933 = vsel %vm1355, %v1815, 0.0
          %v1934 = vadd.f32 %v1932, %v1933
          %v1935 = vsel %vm1355, %v1816, 0.0
          %v1936 = vadd.f32 %v1934, %v1935
          %v1937 = vsel %vm1355, %v1817, 0.0
          %v1938 = vadd.f32 %v1936, %v1937
          %v1939 = vsel %vm1355, %v1818, 0.0
          %v1940 = vadd.f32 %v1938, %v1939
          %v1941 = vsel %vm1355, %v1819, 0.0
          %v1942 = vadd.f32 %v1940, %v1941
          %v1943 = vsel %vm1355, %v1820, 0.0
          %v1944 = vadd.f32 %v1942, %v1943
          %v1945 = vsel %vm1355, %v1821, 0.0
          %v1946 = vadd.f32 %v1944, %v1945
          %v1947 = vsel %vm1355, %v1822, 0.0
          %v1948 = vadd.f32 %v1946, %v1947
          %v1949 = vsel %vm1355, %v1823, 0.0
          %v1950 = vadd.f32 %v1948, %v1949
          %v1951 = vrot.slane %v1950, 4
          %v1952 = vadd.f32 %v1950, %v1951
          %v1953 = vrot.slane %v1952, 2
          %v1954 = vadd.f32 %v1952, %v1953
          %v1955 = vrot.slane %v1954, 1
          %v1956 = vadd.f32 %v1954, %v1955
          %v1957 = vadd.f32 %v1759, %v1956
          %1958 = vst.msk [vmem:[#allocation5] sm:$0x1] %vm1757, %v1957
        $region44: #{_mm_call.1} parent=31 // pred_fallthru
          _
        %s1959 = smul.u32 64, %s25
        %p1960 = scmp.lt.s32.totalorder %s1959, 3199
        %s1961 = scalar_select %p1960, %s1959, 3199
        %p1962 = scmp.lt.s32.totalorder %s24, 0
        %s1963 = scalar_select %p1962, %s24, 0
        %s1964 = sadd.s32 %s1963, %s1961
        %s1965 = smul.addr %s1964, 8
        %s1966 = scalar_lea.vmem %s3, %s1965
        // Predicated region
        $region45: #{_mm_call.1} parent=31 // pred_check
          %p1967 = pneg %p140
        $region46: #{_mm_call.1} parent=31 // pred_check_branch
          %1969 = sbr.rel (%p1967) target = $region48
        $region47: #{_mm_call.1} parent=31 // pred_region
          %s1970 = smul.u32 64, %s25
        $region48: #{_mm_call.1} parent=31 // pred_fallthru
          _
        // Predicated region
        $region49: #{_mm_call.1} parent=31 // pred_check
          %p1971 = pneg %p166
        $region50: #{_mm_call.1} parent=31 // pred_check_branch
          %1973 = sbr.rel (%p1971) target = $region52
        $region51: #{_mm_call.1} parent=31 // pred_region
          %s1975 = ssub.s32 16, 16
          %1976 = vsyncadd [#allocation4], %s1975
          %s1977 = smul.addr %s24, 16
          %s1978 = scalar_lea.hbm %s4, %s1977
          %s1980 = sshll.u32 [#allocation3], 4
          %s1981 = int_to_ptr.vmem [resolvable:$true] %s1980
          %1983 = dma.vmem_to_hbm [thread:$0]  %s1981, 16, %s1978, [#allocation4]
        $region52: #{_mm_call.1} parent=31 // pred_fallthru
          _
        // Predicated region
        $region53: #{_mm_call.1} parent=31 // pred_check
          %p1984 = pneg %p192
        $region54: #{_mm_call.1} parent=31 // pred_check_branch
          %1986 = sbr.rel (%p1984) target = $region56
        $region55: #{_mm_call.1} parent=31 // pred_region
          %s1988 = ssub.s32 16, 16
          %1989 = vsyncadd [#allocation6], %s1988
          %s1990 = smul.addr %s24, 16
          %s1991 = scalar_lea.hbm %s5, %s1990
          %s1993 = sshll.u32 [#allocation5], 4
          %s1994 = int_to_ptr.vmem [resolvable:$true] %s1993
          %1996 = dma.vmem_to_hbm [thread:$0]  %s1994, 16, %s1991, [#allocation6]
        $region56: #{_mm_call.1} parent=31 // pred_fallthru
          _
        // Predicated region
        $region57: #{_mm_call.1} parent=31 // pred_check
          %p1997 = pneg %p166
        $region58: #{_mm_call.1} parent=31 // pred_check_branch
          %1999 = sbr.rel (%p1997) target = $region60
        $region59: #{_mm_call.1} parent=31 // pred_region
          %2000 = dma.done [#allocation4], 16
        $region60: #{_mm_call.1} parent=31 // pred_fallthru
          _
        // Predicated region
        $region61: #{_mm_call.1} parent=31 // pred_check
          %p2001 = pneg %p192
        $region62: #{_mm_call.1} parent=31 // pred_check_branch
          %2003 = sbr.rel (%p2001) target = $region64
        $region63: #{_mm_call.1} parent=31 // pred_region
          %2004 = dma.done [#allocation6], 16
        $region64: #{_mm_call.1} parent=31 // pred_fallthru
          _
      $region32: #{_mm_call.1} parent=5 // pred_fallthru
        _
      %p2005 = scmp.le.s32.totalorder 2, %s14
      // Predicated region
      $region65: #{_mm_call.1} parent=5 // pred_check
        %p2006 = pneg %p2005
      $region66: #{_mm_call.1} parent=5 // pred_check_branch
        %2008 = sbr.rel (%p2006) target = $region68
      $region67: #{_mm_call.1} parent=5 // pred_region
        %s2009 = ssub.s32 %s14, 2
        // Predicated region
        $region69: #{_mm_call.1} parent=67 // pred_check
          %p2010 = pneg %p146
        $region70: #{_mm_call.1} parent=67 // pred_check_branch
          %2012 = sbr.rel (%p2010) target = $region72
        $region71: #{_mm_call.1} parent=67 // pred_region
          %s2013 = smul.u32 64, %s28
          %p2014 = scmp.lt.s32.totalorder %s2013, 3199
          %s2015 = scalar_select %p2014, %s2013, 3199
          %p2016 = scmp.lt.s32.totalorder %s27, 0
          %s2017 = scalar_select %p2016, %s27, 0
          %s2018 = sadd.s32 %s2017, %s2015
          %s2019 = smul.addr %s2018, 8
          %s2020 = scalar_lea.vmem %s3, %s2019
        $region72: #{_mm_call.1} parent=67 // pred_fallthru
          _
      $region68: #{_mm_call.1} parent=5 // pred_fallthru
        _
    $region6: #{_mm_call.1} parent=1 // loop_footer
      %s18 = sadd.s32 1, %s14
    $region7: #{_mm_call.1} parent=1 // loop_footer_branch
      %13 = sbr.rel target = $region3
    $region8: #{_mm_call.1} parent=1 // loop_exit
      _
    %2021 = vsyncpa [#allocation4], 1
    %s2022 = scalar_lea.sflag [#allocation4], 1
    %2023 = vsyncpa %s2022, 1
    %2024 = vsyncpa [#allocation6], 1

</llo_original>
